<compile_context>
chip_gen: v5e
topology: v5e:2x2
jax: 0.10.0
libtpu: 0.0.40
codegen_flags: <defaults>
</compile_context>

<pallas_src>
import math
import numpy as np
import jax
import jax.numpy as jnp
from jax.experimental import pallas as pl
from jax.experimental.pallas import tpu as pltpu

# --- small, self-consistent shapes (d_word_vec == d_model as the forward requires) ---
B, L = 2, 8
INPUT_SIZE = 16
D_MODEL = 32
N_HEAD = 4
D_K = 8
D_V = 8
D_INNER = 64
N_LAYERS = 2
MAX_SEQ_LEN = 16
LN_EPS = 1e-5


def get_sinusoid_encoding_table(n_position, d_hid, padding_idx=None):
    """Sinusoid position encoding table (same math as the PyTorch helper)."""
    def cal_angle(position, hid_idx):
        return position / np.power(10000, 2 * (hid_idx // 2) / d_hid)

    def get_posi_angle_vec(position):
        return [cal_angle(position, hid_j) for hid_j in range(d_hid)]

    tbl = np.array([get_posi_angle_vec(p) for p in range(n_position)])
    tbl[:, 0::2] = np.sin(tbl[:, 0::2])
    tbl[:, 1::2] = np.cos(tbl[:, 1::2])
    if padding_idx is not None:
        tbl[padding_idx] = 0.0
    return jnp.asarray(tbl, dtype=jnp.float32)


def _layer_norm(x, g, b):
    mu = jnp.mean(x, axis=-1, keepdims=True)
    var = jnp.mean((x - mu) * (x - mu), axis=-1, keepdims=True)
    return (x - mu) * jax.lax.rsqrt(var + LN_EPS) * g + b


def _encoder_kernel(src_ref, embw_ref, embb_ref, pos_ref, bias_ref,
                    wqkv_ref, bqkv_ref, fcw_ref, fcb_ref, ln1g_ref, ln1b_ref,
                    w1_ref, b1_ref, w2_ref, b2_ref, ln2g_ref, ln2b_ref,
                    out_ref):
    # ---- fused embedding: src_emb(src_seq) + position_enc(src_pos) (rows pre-gathered) ----
    x = (jnp.dot(src_ref[...].astype(jnp.bfloat16), embw_ref[...],
                 preferred_element_type=jnp.float32)
         + embb_ref[...] + pos_ref[...])                      # (B*L, D_MODEL) f32 residual stream

    attn_bias = bias_ref[...]                                 # (B*L, B*L): 0 / -1e30 block-diagonal

    # ---- static in-kernel layer loop; all stacked weights are VMEM-resident ----
    # (fine at N_LAYERS=2; switch to lax.fori_loop with dynamic wqkv_ref[l] indexing at depth)
    for l in range(N_LAYERS):
        xb = x.astype(jnp.bfloat16)
        # fused, head-major packed QKV projection; 1/sqrt(d_k) already folded into the Q columns
        qkv = jnp.dot(xb, wqkv_ref[l], preferred_element_type=jnp.float32) + bqkv_ref[l]
        qkv = qkv.astype(jnp.bfloat16)                        # (B*L, N_HEAD * 3*D_K)

        heads = []
        for h in range(N_HEAD):
            base = 3 * D_K * h                                # [q_h | k_h | v_h] lane block
            q_h = qkv[:, base:base + D_K]                     # (B*L, D_K)  lane slices only,
            k_h = qkv[:, base + D_K:base + 2 * D_K]           # no sublane data movement
            v_h = qkv[:, base + 2 * D_K:base + 3 * D_K]
            # NT matmul over the flattened token axis: no transposes, no head fold
            s = jax.lax.dot_general(q_h, k_h, (((1,), (1,)), ((), ())),
                                    preferred_element_type=jnp.float32)   # (B*L, B*L)
            s = s + attn_bias                                 # mask cross-example entries
            s = s - jnp.max(s, axis=-1, keepdims=True)
            p = jnp.exp(s)
            p = p * pl.reciprocal(jnp.sum(p, axis=-1, keepdims=True), approx=True)
            heads.append(jnp.dot(p.astype(jnp.bfloat16), v_h,
                                 preferred_element_type=jnp.float32))     # (B*L, D_V)
        attn = jnp.concatenate(heads, axis=-1)                # (B*L, N_HEAD*D_V): one lane concat

        proj = jnp.dot(attn.astype(jnp.bfloat16), fcw_ref[l],
                       preferred_element_type=jnp.float32) + fcb_ref[l]
        y = _layer_norm(proj + x, ln1g_ref[l], ln1b_ref[l])

        # position-wise FFN (Conv1d kernel_size=1 == pointwise linear)
        hdn = jnp.maximum(
            jnp.dot(y.astype(jnp.bfloat16), w1_ref[l], preferred_element_type=jnp.float32)
            + b1_ref[l], 0.0)
        z = jnp.dot(hdn.astype(jnp.bfloat16), w2_ref[l],
                    preferred_element_type=jnp.float32) + b2_ref[l]
        x = _layer_norm(z + y, ln2g_ref[l], ln2b_ref[l])

    out_ref[...] = x.astype(out_ref.dtype)                    # flat (B*L, D_MODEL), written once


def encoder_forward(src_flat, pos_rows, attn_bias, emb_w_bf16, emb_b, fused_layer_params):
    # Gridless single pallas_call: every operand is a whole-array VMEM block (~60 KB total),
    # comfortably within v5e/v6e (128 MiB) and v7x (64 MiB) VMEM.
    operands = [src_flat, emb_w_bf16, emb_b.reshape(1, D_MODEL), pos_rows, attn_bias,
                *fused_layer_params]

    BL, HD = B * L, N_HEAD * D_K
    per_layer_flops = (2 * BL * D_MODEL * 3 * HD              # fused QKV projection
                       + N_HEAD * 4 * BL * BL * D_K           # scores + p@v (block-diag over B*L)
                       + 2 * BL * HD * D_MODEL                # attention output projection
                       + 4 * BL * D_MODEL * D_INNER)          # FFN up + down
    flops = 2 * BL * INPUT_SIZE * D_MODEL + N_LAYERS * per_layer_flops
    transcendentals = N_LAYERS * (N_HEAD * BL * BL + 6 * BL)  # exp + recip + rsqrt
    bytes_accessed = sum(a.size * a.dtype.itemsize for a in operands) + BL * D_MODEL * 4

    out_flat = pl.pallas_call(
        _encoder_kernel,
        out_shape=jax.ShapeDtypeStruct((BL, D_MODEL), jnp.float32),
        in_specs=[pl.BlockSpec(memory_space=pltpu.MemorySpace.VMEM) for _ in operands],
        out_specs=pl.BlockSpec(memory_space=pltpu.MemorySpace.VMEM),
        compiler_params=pltpu.CompilerParams(vmem_limit_bytes=32 * 1024 * 1024),
        cost_estimate=pl.CostEstimate(flops=flops, transcendentals=transcendentals,
                                      bytes_accessed=bytes_accessed),
    )(*operands)
    return out_flat.reshape(B, L, D_MODEL)                    # free metadata reshape in XLA


def init_params(key):
    keys = iter(jax.random.split(key, 32))

    def nrm(shape, scale=0.08):
        return scale * jax.random.normal(next(keys), shape, dtype=jnp.float32)

    emb_w = nrm((INPUT_SIZE, D_MODEL))            # nn.Linear(input_size, d_word_vec), transposed
    emb_b = nrm((D_MODEL,))

    def stack(shape):
        return nrm((N_LAYERS,) + shape)

    wq = stack((D_MODEL, N_HEAD * D_K)); bq = stack((1, N_HEAD * D_K))
    wk = stack((D_MODEL, N_HEAD * D_K)); bk = stack((1, N_HEAD * D_K))
    wv = stack((D_MODEL, N_HEAD * D_V)); bv = stack((1, N_HEAD * D_V))
    fcw = stack((N_HEAD * D_V, D_MODEL)); fcb = stack((1, D_MODEL))
    ln1g = jnp.ones((N_LAYERS, 1, D_MODEL), jnp.float32)
    ln1b = jnp.zeros((N_LAYERS, 1, D_MODEL), jnp.float32)
    w1 = stack((D_MODEL, D_INNER)); b1 = stack((1, D_INNER))
    w2 = stack((D_INNER, D_MODEL)); b2 = stack((1, D_MODEL))
    ln2g = jnp.ones((N_LAYERS, 1, D_MODEL), jnp.float32)
    ln2b = jnp.zeros((N_LAYERS, 1, D_MODEL), jnp.float32)

    raw = [wq, bq, wk, bk, wv, bv, fcw, fcb, ln1g, ln1b,
           w1, b1, w2, b2, ln2g, ln2b]
    return emb_w, emb_b, raw


def fuse_params(raw):
    """Host-side weight prep: head-major packed Q|K|V, 1/sqrt(d_k) folded into Q, bf16 weights."""
    (wq, bq, wk, bk, wv, bv, fcw, fcb, ln1g, ln1b,
     w1, b1, w2, b2, ln2g, ln2b) = raw
    scale = 1.0 / math.sqrt(D_K)
    wq4 = (wq * scale).reshape(N_LAYERS, D_MODEL, N_HEAD, D_K)
    wk4 = wk.reshape(N_LAYERS, D_MODEL, N_HEAD, D_K)
    wv4 = wv.reshape(N_LAYERS, D_MODEL, N_HEAD, D_V)
    wqkv = jnp.concatenate([wq4, wk4, wv4], axis=-1)          # per-head [q|k|v] contiguous
    wqkv = wqkv.reshape(N_LAYERS, D_MODEL, N_HEAD * 3 * D_K)
    bq4 = (bq * scale).reshape(N_LAYERS, 1, N_HEAD, D_K)
    bk4 = bk.reshape(N_LAYERS, 1, N_HEAD, D_K)
    bv4 = bv.reshape(N_LAYERS, 1, N_HEAD, D_V)
    bqkv = jnp.concatenate([bq4, bk4, bv4], axis=-1).reshape(N_LAYERS, 1, N_HEAD * 3 * D_K)
    # matmul operands in bf16 (MXU fast path); biases / LN params stay f32
    return [wqkv.astype(jnp.bfloat16), bqkv,
            fcw.astype(jnp.bfloat16), fcb, ln1g, ln1b,
            w1.astype(jnp.bfloat16), b1, w2.astype(jnp.bfloat16), b2,
            ln2g, ln2b]


def reference_forward(src_seq, src_pos, emb_w, emb_b, raw_params, pos_table):
    """Pure-JAX f32 reference mirroring the PyTorch forward (dropout off)."""
    (wq, bq, wk, bk, wv, bv, fcw, fcb, ln1g, ln1b,
     w1, b1, w2, b2, ln2g, ln2b) = raw_params
    x = src_seq @ emb_w + emb_b + pos_table[src_pos]
    for l in range(N_LAYERS):
        q = (x @ wq[l] + bq[l]).reshape(B, L, N_HEAD, D_K)
        k = (x @ wk[l] + bk[l]).reshape(B, L, N_HEAD, D_K)
        v = (x @ wv[l] + bv[l]).reshape(B, L, N_HEAD, D_V)
        s = jnp.einsum('blhd,bmhd->bhlm', q, k) / math.sqrt(D_K)
        p = jax.nn.softmax(s, axis=-1)
        o = jnp.einsum('bhlm,bmhd->blhd', p, v).reshape(B, L, N_HEAD * D_V)
        o = o @ fcw[l] + fcb[l]
        y = _layer_norm(o + x, ln1g[l], ln1b[l])
        h = jax.nn.relu(y @ w1[l] + b1[l])
        z = h @ w2[l] + b2[l]
        x = _layer_norm(z + y, ln2g[l], ln2b[l])
    return x


if __name__ == "__main__":
    key = jax.random.PRNGKey(0)
    k_in, k_par = jax.random.split(key)
    src_seq = jax.random.normal(k_in, (B, L, INPUT_SIZE), dtype=jnp.float32)
    src_pos = jnp.broadcast_to(jnp.arange(1, L + 1, dtype=jnp.int32), (B, L))

    emb_w, emb_b, raw_layer_params = init_params(k_par)
    pos_table = get_sinusoid_encoding_table(MAX_SEQ_LEN + 1, D_MODEL, padding_idx=0)

    # host-side glue (all free / one-time constants):
    src_flat = src_seq.reshape(B * L, INPUT_SIZE)                      # metadata reshape
    pos_rows = pos_table[src_pos].reshape(B * L, D_MODEL)              # frozen embedding gather
    tok_b = np.arange(B * L) // L                                      # block-diagonal attn bias
    attn_bias = jnp.asarray(np.where(tok_b[:, None] == tok_b[None, :], 0.0, -1e30),
                            dtype=jnp.float32)
    fused_layer_params = fuse_params(raw_layer_params)                 # QKV fuse + scale fold + bf16

    out = encoder_forward(src_flat, pos_rows, attn_bias,
                          emb_w.astype(jnp.bfloat16), emb_b, fused_layer_params)
    out = jax.block_until_ready(out)

    ref = jax.block_until_ready(
        reference_forward(src_seq, src_pos, emb_w, emb_b, raw_layer_params, pos_table))

    assert out.shape == (B, L, D_MODEL)
    # bf16 MXU operands (f32 accumulation) + approx reciprocal vs. the f32 reference
    np.testing.assert_allclose(np.asarray(out), np.asarray(ref), rtol=3e-2, atol=3e-2)
    print("KERNEL_OK")
</pallas_src>

<mosaic_0001>
module attributes {stable_mosaic.version = 11 : i64} {
  func.func @_encoder_kernel(%arg0: memref<16x16xf32, #tpu.memory_space<vmem>>, %arg1: memref<16x32xbf16, #tpu.memory_space<vmem>>, %arg2: memref<1x32xf32, #tpu.memory_space<vmem>>, %arg3: memref<16x32xf32, #tpu.memory_space<vmem>>, %arg4: memref<16x16xf32, #tpu.memory_space<vmem>>, %arg5: memref<2x32x96xbf16, #tpu.memory_space<vmem>>, %arg6: memref<2x1x96xf32, #tpu.memory_space<vmem>>, %arg7: memref<2x32x32xbf16, #tpu.memory_space<vmem>>, %arg8: memref<2x1x32xf32, #tpu.memory_space<vmem>>, %arg9: memref<2x1x32xf32, #tpu.memory_space<vmem>>, %arg10: memref<2x1x32xf32, #tpu.memory_space<vmem>>, %arg11: memref<2x32x64xbf16, #tpu.memory_space<vmem>>, %arg12: memref<2x1x64xf32, #tpu.memory_space<vmem>>, %arg13: memref<2x64x32xbf16, #tpu.memory_space<vmem>>, %arg14: memref<2x1x32xf32, #tpu.memory_space<vmem>>, %arg15: memref<2x1x32xf32, #tpu.memory_space<vmem>>, %arg16: memref<2x1x32xf32, #tpu.memory_space<vmem>>, %arg17: memref<16x32xf32, #tpu.memory_space<vmem>>) attributes {dimension_semantics = [], scalar_prefetch = 0 : i64, scratch_operands = 0 : i64, tpu.core_type = #tpu.core_type<tc>} {
    %c0 = arith.constant 0 : index
    %c0_0 = arith.constant 0 : index
    %0 = vector.load %arg0[%c0, %c0_0] : memref<16x16xf32, #tpu.memory_space<vmem>>, vector<16x16xf32>
    %1 = arith.truncf %0 : vector<16x16xf32> to vector<16x16xbf16>
    %c0_1 = arith.constant 0 : index
    %c0_2 = arith.constant 0 : index
    %2 = vector.load %arg1[%c0_1, %c0_2] : memref<16x32xbf16, #tpu.memory_space<vmem>>, vector<16x32xbf16>
    %cst = arith.constant dense<0.000000e+00> : vector<16x32xf32>
    %3 = tpu.matmul %1, %2, %cst {dimension_numbers = #tpu.dot_dimension_numbers<[1], [0], [0], [1], [0, 0, 1, 1], [], []>} : vector<16x16xbf16>, vector<16x32xbf16>, vector<16x32xf32> -> vector<16x32xf32>
    %c0_3 = arith.constant 0 : index
    %c0_4 = arith.constant 0 : index
    %4 = vector.load %arg2[%c0_3, %c0_4] : memref<1x32xf32, #tpu.memory_space<vmem>>, vector<1x32xf32>
    %5 = vector.broadcast %4 : vector<1x32xf32> to vector<16x32xf32>
    %6 = arith.addf %3, %5 : vector<16x32xf32>
    %c0_5 = arith.constant 0 : index
    %c0_6 = arith.constant 0 : index
    %7 = vector.load %arg3[%c0_5, %c0_6] : memref<16x32xf32, #tpu.memory_space<vmem>>, vector<16x32xf32>
    %8 = arith.addf %6, %7 : vector<16x32xf32>
    %c0_7 = arith.constant 0 : index
    %c0_8 = arith.constant 0 : index
    %9 = vector.load %arg4[%c0_7, %c0_8] : memref<16x16xf32, #tpu.memory_space<vmem>>, vector<16x16xf32>
    %10 = arith.truncf %8 : vector<16x32xf32> to vector<16x32xbf16>
    %c0_9 = arith.constant 0 : index
    %c0_10 = arith.constant 0 : index
    %c0_11 = arith.constant 0 : index
    %11 = vector.load %arg5[%c0_9, %c0_10, %c0_11] : memref<2x32x96xbf16, #tpu.memory_space<vmem>>, vector<1x32x96xbf16>
    %12 = vector.shape_cast %11 : vector<1x32x96xbf16> to vector<32x96xbf16>
    %cst_12 = arith.constant dense<0.000000e+00> : vector<16x96xf32>
    %13 = tpu.matmul %10, %12, %cst_12 {dimension_numbers = #tpu.dot_dimension_numbers<[1], [0], [0], [1], [0, 0, 1, 1], [], []>} : vector<16x32xbf16>, vector<32x96xbf16>, vector<16x96xf32> -> vector<16x96xf32>
    %c0_13 = arith.constant 0 : index
    %c0_14 = arith.constant 0 : index
    %c0_15 = arith.constant 0 : index
    %14 = vector.load %arg6[%c0_13, %c0_14, %c0_15] : memref<2x1x96xf32, #tpu.memory_space<vmem>>, vector<1x1x96xf32>
    %15 = vector.shape_cast %14 : vector<1x1x96xf32> to vector<1x96xf32>
    %16 = vector.broadcast %15 : vector<1x96xf32> to vector<16x96xf32>
    %17 = arith.addf %13, %16 : vector<16x96xf32>
    %18 = arith.truncf %17 : vector<16x96xf32> to vector<16x96xbf16>
    %19 = vector.extract_strided_slice %18 {offsets = [0, 0], sizes = [16, 8], strides = [1, 1]} : vector<16x96xbf16> to vector<16x8xbf16>
    %20 = vector.extract_strided_slice %18 {offsets = [0, 8], sizes = [16, 8], strides = [1, 1]} : vector<16x96xbf16> to vector<16x8xbf16>
    %21 = vector.extract_strided_slice %18 {offsets = [0, 16], sizes = [16, 8], strides = [1, 1]} : vector<16x96xbf16> to vector<16x8xbf16>
    %cst_16 = arith.constant dense<0.000000e+00> : vector<16x16xf32>
    %22 = tpu.matmul %19, %20, %cst_16 {dimension_numbers = #tpu.dot_dimension_numbers<[1], [1], [0], [0], [0, 0, 1, 0], [], []>} : vector<16x8xbf16>, vector<16x8xbf16>, vector<16x16xf32> -> vector<16x16xf32>
    %23 = arith.addf %22, %9 : vector<16x16xf32>
    %cst_17 = arith.constant dense<0xFF800000> : vector<16xf32>
    %24 = vector.multi_reduction <maximumf>, %23, %cst_17 [1] : vector<16x16xf32> to vector<16xf32>
    %25 = vector.shape_cast %24 : vector<16xf32> to vector<16x1xf32>
    %26 = vector.broadcast %25 : vector<16x1xf32> to vector<16x16xf32>
    %27 = arith.subf %23, %26 : vector<16x16xf32>
    %28 = math.exp %27 : vector<16x16xf32>
    %cst_18 = arith.constant dense<0.000000e+00> : vector<16xf32>
    %29 = vector.multi_reduction <add>, %28, %cst_18 [1] : vector<16x16xf32> to vector<16xf32>
    %30 = vector.shape_cast %29 : vector<16xf32> to vector<16x1xf32>
    %31 = tpu.reciprocal %30 {approx = true} : vector<16x1xf32> -> vector<16x1xf32>
    %32 = vector.broadcast %31 : vector<16x1xf32> to vector<16x16xf32>
    %33 = arith.mulf %28, %32 : vector<16x16xf32>
    %34 = arith.truncf %33 : vector<16x16xf32> to vector<16x16xbf16>
    %cst_19 = arith.constant dense<0.000000e+00> : vector<16x8xf32>
    %35 = tpu.matmul %34, %21, %cst_19 {dimension_numbers = #tpu.dot_dimension_numbers<[1], [0], [0], [1], [0, 0, 1, 1], [], []>} : vector<16x16xbf16>, vector<16x8xbf16>, vector<16x8xf32> -> vector<16x8xf32>
    %36 = vector.extract_strided_slice %18 {offsets = [0, 24], sizes = [16, 8], strides = [1, 1]} : vector<16x96xbf16> to vector<16x8xbf16>
    %37 = vector.extract_strided_slice %18 {offsets = [0, 32], sizes = [16, 8], strides = [1, 1]} : vector<16x96xbf16> to vector<16x8xbf16>
    %38 = vector.extract_strided_slice %18 {offsets = [0, 40], sizes = [16, 8], strides = [1, 1]} : vector<16x96xbf16> to vector<16x8xbf16>
    %cst_20 = arith.constant dense<0.000000e+00> : vector<16x16xf32>
    %39 = tpu.matmul %36, %37, %cst_20 {dimension_numbers = #tpu.dot_dimension_numbers<[1], [1], [0], [0], [0, 0, 1, 0], [], []>} : vector<16x8xbf16>, vector<16x8xbf16>, vector<16x16xf32> -> vector<16x16xf32>
    %40 = arith.addf %39, %9 : vector<16x16xf32>
    %cst_21 = arith.constant dense<0xFF800000> : vector<16xf32>
    %41 = vector.multi_reduction <maximumf>, %40, %cst_21 [1] : vector<16x16xf32> to vector<16xf32>
    %42 = vector.shape_cast %41 : vector<16xf32> to vector<16x1xf32>
    %43 = vector.broadcast %42 : vector<16x1xf32> to vector<16x16xf32>
    %44 = arith.subf %40, %43 : vector<16x16xf32>
    %45 = math.exp %44 : vector<16x16xf32>
    %cst_22 = arith.constant dense<0.000000e+00> : vector<16xf32>
    %46 = vector.multi_reduction <add>, %45, %cst_22 [1] : vector<16x16xf32> to vector<16xf32>
    %47 = vector.shape_cast %46 : vector<16xf32> to vector<16x1xf32>
    %48 = tpu.reciprocal %47 {approx = true} : vector<16x1xf32> -> vector<16x1xf32>
    %49 = vector.broadcast %48 : vector<16x1xf32> to vector<16x16xf32>
    %50 = arith.mulf %45, %49 : vector<16x16xf32>
    %51 = arith.truncf %50 : vector<16x16xf32> to vector<16x16xbf16>
    %cst_23 = arith.constant dense<0.000000e+00> : vector<16x8xf32>
    %52 = tpu.matmul %51, %38, %cst_23 {dimension_numbers = #tpu.dot_dimension_numbers<[1], [0], [0], [1], [0, 0, 1, 1], [], []>} : vector<16x16xbf16>, vector<16x8xbf16>, vector<16x8xf32> -> vector<16x8xf32>
    %53 = vector.extract_strided_slice %18 {offsets = [0, 48], sizes = [16, 8], strides = [1, 1]} : vector<16x96xbf16> to vector<16x8xbf16>
    %54 = vector.extract_strided_slice %18 {offsets = [0, 56], sizes = [16, 8], strides = [1, 1]} : vector<16x96xbf16> to vector<16x8xbf16>
    %55 = vector.extract_strided_slice %18 {offsets = [0, 64], sizes = [16, 8], strides = [1, 1]} : vector<16x96xbf16> to vector<16x8xbf16>
    %cst_24 = arith.constant dense<0.000000e+00> : vector<16x16xf32>
    %56 = tpu.matmul %53, %54, %cst_24 {dimension_numbers = #tpu.dot_dimension_numbers<[1], [1], [0], [0], [0, 0, 1, 0], [], []>} : vector<16x8xbf16>, vector<16x8xbf16>, vector<16x16xf32> -> vector<16x16xf32>
    %57 = arith.addf %56, %9 : vector<16x16xf32>
    %cst_25 = arith.constant dense<0xFF800000> : vector<16xf32>
    %58 = vector.multi_reduction <maximumf>, %57, %cst_25 [1] : vector<16x16xf32> to vector<16xf32>
    %59 = vector.shape_cast %58 : vector<16xf32> to vector<16x1xf32>
    %60 = vector.broadcast %59 : vector<16x1xf32> to vector<16x16xf32>
    %61 = arith.subf %57, %60 : vector<16x16xf32>
    %62 = math.exp %61 : vector<16x16xf32>
    %cst_26 = arith.constant dense<0.000000e+00> : vector<16xf32>
    %63 = vector.multi_reduction <add>, %62, %cst_26 [1] : vector<16x16xf32> to vector<16xf32>
    %64 = vector.shape_cast %63 : vector<16xf32> to vector<16x1xf32>
    %65 = tpu.reciprocal %64 {approx = true} : vector<16x1xf32> -> vector<16x1xf32>
    %66 = vector.broadcast %65 : vector<16x1xf32> to vector<16x16xf32>
    %67 = arith.mulf %62, %66 : vector<16x16xf32>
    %68 = arith.truncf %67 : vector<16x16xf32> to vector<16x16xbf16>
    %cst_27 = arith.constant dense<0.000000e+00> : vector<16x8xf32>
    %69 = tpu.matmul %68, %55, %cst_27 {dimension_numbers = #tpu.dot_dimension_numbers<[1], [0], [0], [1], [0, 0, 1, 1], [], []>} : vector<16x16xbf16>, vector<16x8xbf16>, vector<16x8xf32> -> vector<16x8xf32>
    %70 = vector.extract_strided_slice %18 {offsets = [0, 72], sizes = [16, 8], strides = [1, 1]} : vector<16x96xbf16> to vector<16x8xbf16>
    %71 = vector.extract_strided_slice %18 {offsets = [0, 80], sizes = [16, 8], strides = [1, 1]} : vector<16x96xbf16> to vector<16x8xbf16>
    %72 = vector.extract_strided_slice %18 {offsets = [0, 88], sizes = [16, 8], strides = [1, 1]} : vector<16x96xbf16> to vector<16x8xbf16>
    %cst_28 = arith.constant dense<0.000000e+00> : vector<16x16xf32>
    %73 = tpu.matmul %70, %71, %cst_28 {dimension_numbers = #tpu.dot_dimension_numbers<[1], [1], [0], [0], [0, 0, 1, 0], [], []>} : vector<16x8xbf16>, vector<16x8xbf16>, vector<16x16xf32> -> vector<16x16xf32>
    %74 = arith.addf %73, %9 : vector<16x16xf32>
    %cst_29 = arith.constant dense<0xFF800000> : vector<16xf32>
    %75 = vector.multi_reduction <maximumf>, %74, %cst_29 [1] : vector<16x16xf32> to vector<16xf32>
    %76 = vector.shape_cast %75 : vector<16xf32> to vector<16x1xf32>
    %77 = vector.broadcast %76 : vector<16x1xf32> to vector<16x16xf32>
    %78 = arith.subf %74, %77 : vector<16x16xf32>
    %79 = math.exp %78 : vector<16x16xf32>
    %cst_30 = arith.constant dense<0.000000e+00> : vector<16xf32>
    %80 = vector.multi_reduction <add>, %79, %cst_30 [1] : vector<16x16xf32> to vector<16xf32>
    %81 = vector.shape_cast %80 : vector<16xf32> to vector<16x1xf32>
    %82 = tpu.reciprocal %81 {approx = true} : vector<16x1xf32> -> vector<16x1xf32>
    %83 = vector.broadcast %82 : vector<16x1xf32> to vector<16x16xf32>
    %84 = arith.mulf %79, %83 : vector<16x16xf32>
    %85 = arith.truncf %84 : vector<16x16xf32> to vector<16x16xbf16>
    %cst_31 = arith.constant dense<0.000000e+00> : vector<16x8xf32>
    %86 = tpu.matmul %85, %72, %cst_31 {dimension_numbers = #tpu.dot_dimension_numbers<[1], [0], [0], [1], [0, 0, 1, 1], [], []>} : vector<16x16xbf16>, vector<16x8xbf16>, vector<16x8xf32> -> vector<16x8xf32>
    %87 = tpu.concatenate %35, %52, %69, %86 in 1 : vector<16x8xf32>, vector<16x8xf32>, vector<16x8xf32>, vector<16x8xf32> -> vector<16x32xf32>
    %88 = arith.truncf %87 : vector<16x32xf32> to vector<16x32xbf16>
    %c0_32 = arith.constant 0 : index
    %c0_33 = arith.constant 0 : index
    %c0_34 = arith.constant 0 : index
    %89 = vector.load %arg7[%c0_32, %c0_33, %c0_34] : memref<2x32x32xbf16, #tpu.memory_space<vmem>>, vector<1x32x32xbf16>
    %90 = vector.shape_cast %89 : vector<1x32x32xbf16> to vector<32x32xbf16>
    %cst_35 = arith.constant dense<0.000000e+00> : vector<16x32xf32>
    %91 = tpu.matmul %88, %90, %cst_35 {dimension_numbers = #tpu.dot_dimension_numbers<[1], [0], [0], [1], [0, 0, 1, 1], [], []>} : vector<16x32xbf16>, vector<32x32xbf16>, vector<16x32xf32> -> vector<16x32xf32>
    %c0_36 = arith.constant 0 : index
    %c0_37 = arith.constant 0 : index
    %c0_38 = arith.constant 0 : index
    %92 = vector.load %arg8[%c0_36, %c0_37, %c0_38] : memref<2x1x32xf32, #tpu.memory_space<vmem>>, vector<1x1x32xf32>
    %93 = vector.shape_cast %92 : vector<1x1x32xf32> to vector<1x32xf32>
    %94 = vector.broadcast %93 : vector<1x32xf32> to vector<16x32xf32>
    %95 = arith.addf %91, %94 : vector<16x32xf32>
    %96 = arith.addf %95, %8 : vector<16x32xf32>
    %c0_39 = arith.constant 0 : index
    %c0_40 = arith.constant 0 : index
    %c0_41 = arith.constant 0 : index
    %97 = vector.load %arg9[%c0_39, %c0_40, %c0_41] : memref<2x1x32xf32, #tpu.memory_space<vmem>>, vector<1x1x32xf32>
    %98 = vector.shape_cast %97 : vector<1x1x32xf32> to vector<1x32xf32>
    %c0_42 = arith.constant 0 : index
    %c0_43 = arith.constant 0 : index
    %c0_44 = arith.constant 0 : index
    %99 = vector.load %arg10[%c0_42, %c0_43, %c0_44] : memref<2x1x32xf32, #tpu.memory_space<vmem>>, vector<1x1x32xf32>
    %100 = vector.shape_cast %99 : vector<1x1x32xf32> to vector<1x32xf32>
    %cst_45 = arith.constant dense<0.000000e+00> : vector<16xf32>
    %101 = vector.multi_reduction <add>, %96, %cst_45 [1] : vector<16x32xf32> to vector<16xf32>
    %102 = vector.shape_cast %101 : vector<16xf32> to vector<16x1xf32>
    %cst_46 = arith.constant 3.200000e+01 : f32
    %103 = vector.broadcast %cst_46 : f32 to vector<16x1xf32>
    %104 = arith.divf %102, %103 : vector<16x1xf32>
    %105 = vector.broadcast %104 : vector<16x1xf32> to vector<16x32xf32>
    %106 = arith.subf %96, %105 : vector<16x32xf32>
    %107 = vector.broadcast %104 : vector<16x1xf32> to vector<16x32xf32>
    %108 = arith.subf %96, %107 : vector<16x32xf32>
    %109 = arith.mulf %106, %108 : vector<16x32xf32>
    %cst_47 = arith.constant dense<0.000000e+00> : vector<16xf32>
    %110 = vector.multi_reduction <add>, %109, %cst_47 [1] : vector<16x32xf32> to vector<16xf32>
    %111 = vector.shape_cast %110 : vector<16xf32> to vector<16x1xf32>
    %cst_48 = arith.constant 3.200000e+01 : f32
    %112 = vector.broadcast %cst_48 : f32 to vector<16x1xf32>
    %113 = arith.divf %111, %112 : vector<16x1xf32>
    %114 = vector.broadcast %104 : vector<16x1xf32> to vector<16x32xf32>
    %115 = arith.subf %96, %114 : vector<16x32xf32>
    %cst_49 = arith.constant 9.99999974E-6 : f32
    %116 = vector.broadcast %cst_49 : f32 to vector<16x1xf32>
    %117 = arith.addf %113, %116 : vector<16x1xf32>
    %118 = math.rsqrt %117 : vector<16x1xf32>
    %119 = vector.broadcast %118 : vector<16x1xf32> to vector<16x32xf32>
    %120 = arith.mulf %115, %119 : vector<16x32xf32>
    %121 = vector.broadcast %98 : vector<1x32xf32> to vector<16x32xf32>
    %122 = arith.mulf %120, %121 : vector<16x32xf32>
    %123 = vector.broadcast %100 : vector<1x32xf32> to vector<16x32xf32>
    %124 = arith.addf %122, %123 : vector<16x32xf32>
    %125 = arith.truncf %124 : vector<16x32xf32> to vector<16x32xbf16>
    %c0_50 = arith.constant 0 : index
    %c0_51 = arith.constant 0 : index
    %c0_52 = arith.constant 0 : index
    %126 = vector.load %arg11[%c0_50, %c0_51, %c0_52] : memref<2x32x64xbf16, #tpu.memory_space<vmem>>, vector<1x32x64xbf16>
    %127 = vector.shape_cast %126 : vector<1x32x64xbf16> to vector<32x64xbf16>
    %cst_53 = arith.constant dense<0.000000e+00> : vector<16x64xf32>
    %128 = tpu.matmul %125, %127, %cst_53 {dimension_numbers = #tpu.dot_dimension_numbers<[1], [0], [0], [1], [0, 0, 1, 1], [], []>} : vector<16x32xbf16>, vector<32x64xbf16>, vector<16x64xf32> -> vector<16x64xf32>
    %c0_54 = arith.constant 0 : index
    %c0_55 = arith.constant 0 : index
    %c0_56 = arith.constant 0 : index
    %129 = vector.load %arg12[%c0_54, %c0_55, %c0_56] : memref<2x1x64xf32, #tpu.memory_space<vmem>>, vector<1x1x64xf32>
    %130 = vector.shape_cast %129 : vector<1x1x64xf32> to vector<1x64xf32>
    %131 = vector.broadcast %130 : vector<1x64xf32> to vector<16x64xf32>
    %132 = arith.addf %128, %131 : vector<16x64xf32>
    %cst_57 = arith.constant 0.000000e+00 : f32
    %133 = vector.broadcast %cst_57 : f32 to vector<16x64xf32>
    %134 = arith.maximumf %132, %133 : vector<16x64xf32>
    %135 = arith.truncf %134 : vector<16x64xf32> to vector<16x64xbf16>
    %c0_58 = arith.constant 0 : index
    %c0_59 = arith.constant 0 : index
    %c0_60 = arith.constant 0 : index
    %136 = vector.load %arg13[%c0_58, %c0_59, %c0_60] : memref<2x64x32xbf16, #tpu.memory_space<vmem>>, vector<1x64x32xbf16>
    %137 = vector.shape_cast %136 : vector<1x64x32xbf16> to vector<64x32xbf16>
    %cst_61 = arith.constant dense<0.000000e+00> : vector<16x32xf32>
    %138 = tpu.matmul %135, %137, %cst_61 {dimension_numbers = #tpu.dot_dimension_numbers<[1], [0], [0], [1], [0, 0, 1, 1], [], []>} : vector<16x64xbf16>, vector<64x32xbf16>, vector<16x32xf32> -> vector<16x32xf32>
    %c0_62 = arith.constant 0 : index
    %c0_63 = arith.constant 0 : index
    %c0_64 = arith.constant 0 : index
    %139 = vector.load %arg14[%c0_62, %c0_63, %c0_64] : memref<2x1x32xf32, #tpu.memory_space<vmem>>, vector<1x1x32xf32>
    %140 = vector.shape_cast %139 : vector<1x1x32xf32> to vector<1x32xf32>
    %141 = vector.broadcast %140 : vector<1x32xf32> to vector<16x32xf32>
    %142 = arith.addf %138, %141 : vector<16x32xf32>
    %143 = arith.addf %142, %124 : vector<16x32xf32>
    %c0_65 = arith.constant 0 : index
    %c0_66 = arith.constant 0 : index
    %c0_67 = arith.constant 0 : index
    %144 = vector.load %arg15[%c0_65, %c0_66, %c0_67] : memref<2x1x32xf32, #tpu.memory_space<vmem>>, vector<1x1x32xf32>
    %145 = vector.shape_cast %144 : vector<1x1x32xf32> to vector<1x32xf32>
    %c0_68 = arith.constant 0 : index
    %c0_69 = arith.constant 0 : index
    %c0_70 = arith.constant 0 : index
    %146 = vector.load %arg16[%c0_68, %c0_69, %c0_70] : memref<2x1x32xf32, #tpu.memory_space<vmem>>, vector<1x1x32xf32>
    %147 = vector.shape_cast %146 : vector<1x1x32xf32> to vector<1x32xf32>
    %cst_71 = arith.constant dense<0.000000e+00> : vector<16xf32>
    %148 = vector.multi_reduction <add>, %143, %cst_71 [1] : vector<16x32xf32> to vector<16xf32>
    %149 = vector.shape_cast %148 : vector<16xf32> to vector<16x1xf32>
    %cst_72 = arith.constant 3.200000e+01 : f32
    %150 = vector.broadcast %cst_72 : f32 to vector<16x1xf32>
    %151 = arith.divf %149, %150 : vector<16x1xf32>
    %152 = vector.broadcast %151 : vector<16x1xf32> to vector<16x32xf32>
    %153 = arith.subf %143, %152 : vector<16x32xf32>
    %154 = vector.broadcast %151 : vector<16x1xf32> to vector<16x32xf32>
    %155 = arith.subf %143, %154 : vector<16x32xf32>
    %156 = arith.mulf %153, %155 : vector<16x32xf32>
    %cst_73 = arith.constant dense<0.000000e+00> : vector<16xf32>
    %157 = vector.multi_reduction <add>, %156, %cst_73 [1] : vector<16x32xf32> to vector<16xf32>
    %158 = vector.shape_cast %157 : vector<16xf32> to vector<16x1xf32>
    %cst_74 = arith.constant 3.200000e+01 : f32
    %159 = vector.broadcast %cst_74 : f32 to vector<16x1xf32>
    %160 = arith.divf %158, %159 : vector<16x1xf32>
    %161 = vector.broadcast %151 : vector<16x1xf32> to vector<16x32xf32>
    %162 = arith.subf %143, %161 : vector<16x32xf32>
    %cst_75 = arith.constant 9.99999974E-6 : f32
    %163 = vector.broadcast %cst_75 : f32 to vector<16x1xf32>
    %164 = arith.addf %160, %163 : vector<16x1xf32>
    %165 = math.rsqrt %164 : vector<16x1xf32>
    %166 = vector.broadcast %165 : vector<16x1xf32> to vector<16x32xf32>
    %167 = arith.mulf %162, %166 : vector<16x32xf32>
    %168 = vector.broadcast %145 : vector<1x32xf32> to vector<16x32xf32>
    %169 = arith.mulf %167, %168 : vector<16x32xf32>
    %170 = vector.broadcast %147 : vector<1x32xf32> to vector<16x32xf32>
    %171 = arith.addf %169, %170 : vector<16x32xf32>
    %172 = arith.truncf %171 : vector<16x32xf32> to vector<16x32xbf16>
    %c1 = arith.constant 1 : index
    %c0_76 = arith.constant 0 : index
    %c0_77 = arith.constant 0 : index
    %173 = vector.load %arg5[%c1, %c0_76, %c0_77] : memref<2x32x96xbf16, #tpu.memory_space<vmem>>, vector<1x32x96xbf16>
    %174 = vector.shape_cast %173 : vector<1x32x96xbf16> to vector<32x96xbf16>
    %cst_78 = arith.constant dense<0.000000e+00> : vector<16x96xf32>
    %175 = tpu.matmul %172, %174, %cst_78 {dimension_numbers = #tpu.dot_dimension_numbers<[1], [0], [0], [1], [0, 0, 1, 1], [], []>} : vector<16x32xbf16>, vector<32x96xbf16>, vector<16x96xf32> -> vector<16x96xf32>
    %c1_79 = arith.constant 1 : index
    %c0_80 = arith.constant 0 : index
    %c0_81 = arith.constant 0 : index
    %176 = vector.load %arg6[%c1_79, %c0_80, %c0_81] : memref<2x1x96xf32, #tpu.memory_space<vmem>>, vector<1x1x96xf32>
    %177 = vector.shape_cast %176 : vector<1x1x96xf32> to vector<1x96xf32>
    %178 = vector.broadcast %177 : vector<1x96xf32> to vector<16x96xf32>
    %179 = arith.addf %175, %178 : vector<16x96xf32>
    %180 = arith.truncf %179 : vector<16x96xf32> to vector<16x96xbf16>
    %181 = vector.extract_strided_slice %180 {offsets = [0, 0], sizes = [16, 8], strides = [1, 1]} : vector<16x96xbf16> to vector<16x8xbf16>
    %182 = vector.extract_strided_slice %180 {offsets = [0, 8], sizes = [16, 8], strides = [1, 1]} : vector<16x96xbf16> to vector<16x8xbf16>
    %183 = vector.extract_strided_slice %180 {offsets = [0, 16], sizes = [16, 8], strides = [1, 1]} : vector<16x96xbf16> to vector<16x8xbf16>
    %cst_82 = arith.constant dense<0.000000e+00> : vector<16x16xf32>
    %184 = tpu.matmul %181, %182, %cst_82 {dimension_numbers = #tpu.dot_dimension_numbers<[1], [1], [0], [0], [0, 0, 1, 0], [], []>} : vector<16x8xbf16>, vector<16x8xbf16>, vector<16x16xf32> -> vector<16x16xf32>
    %185 = arith.addf %184, %9 : vector<16x16xf32>
    %cst_83 = arith.constant dense<0xFF800000> : vector<16xf32>
    %186 = vector.multi_reduction <maximumf>, %185, %cst_83 [1] : vector<16x16xf32> to vector<16xf32>
    %187 = vector.shape_cast %186 : vector<16xf32> to vector<16x1xf32>
    %188 = vector.broadcast %187 : vector<16x1xf32> to vector<16x16xf32>
    %189 = arith.subf %185, %188 : vector<16x16xf32>
    %190 = math.exp %189 : vector<16x16xf32>
    %cst_84 = arith.constant dense<0.000000e+00> : vector<16xf32>
    %191 = vector.multi_reduction <add>, %190, %cst_84 [1] : vector<16x16xf32> to vector<16xf32>
    %192 = vector.shape_cast %191 : vector<16xf32> to vector<16x1xf32>
    %193 = tpu.reciprocal %192 {approx = true} : vector<16x1xf32> -> vector<16x1xf32>
    %194 = vector.broadcast %193 : vector<16x1xf32> to vector<16x16xf32>
    %195 = arith.mulf %190, %194 : vector<16x16xf32>
    %196 = arith.truncf %195 : vector<16x16xf32> to vector<16x16xbf16>
    %cst_85 = arith.constant dense<0.000000e+00> : vector<16x8xf32>
    %197 = tpu.matmul %196, %183, %cst_85 {dimension_numbers = #tpu.dot_dimension_numbers<[1], [0], [0], [1], [0, 0, 1, 1], [], []>} : vector<16x16xbf16>, vector<16x8xbf16>, vector<16x8xf32> -> vector<16x8xf32>
    %198 = vector.extract_strided_slice %180 {offsets = [0, 24], sizes = [16, 8], strides = [1, 1]} : vector<16x96xbf16> to vector<16x8xbf16>
    %199 = vector.extract_strided_slice %180 {offsets = [0, 32], sizes = [16, 8], strides = [1, 1]} : vector<16x96xbf16> to vector<16x8xbf16>
    %200 = vector.extract_strided_slice %180 {offsets = [0, 40], sizes = [16, 8], strides = [1, 1]} : vector<16x96xbf16> to vector<16x8xbf16>
    %cst_86 = arith.constant dense<0.000000e+00> : vector<16x16xf32>
    %201 = tpu.matmul %198, %199, %cst_86 {dimension_numbers = #tpu.dot_dimension_numbers<[1], [1], [0], [0], [0, 0, 1, 0], [], []>} : vector<16x8xbf16>, vector<16x8xbf16>, vector<16x16xf32> -> vector<16x16xf32>
    %202 = arith.addf %201, %9 : vector<16x16xf32>
    %cst_87 = arith.constant dense<0xFF800000> : vector<16xf32>
    %203 = vector.multi_reduction <maximumf>, %202, %cst_87 [1] : vector<16x16xf32> to vector<16xf32>
    %204 = vector.shape_cast %203 : vector<16xf32> to vector<16x1xf32>
    %205 = vector.broadcast %204 : vector<16x1xf32> to vector<16x16xf32>
    %206 = arith.subf %202, %205 : vector<16x16xf32>
    %207 = math.exp %206 : vector<16x16xf32>
    %cst_88 = arith.constant dense<0.000000e+00> : vector<16xf32>
    %208 = vector.multi_reduction <add>, %207, %cst_88 [1] : vector<16x16xf32> to vector<16xf32>
    %209 = vector.shape_cast %208 : vector<16xf32> to vector<16x1xf32>
    %210 = tpu.reciprocal %209 {approx = true} : vector<16x1xf32> -> vector<16x1xf32>
    %211 = vector.broadcast %210 : vector<16x1xf32> to vector<16x16xf32>
    %212 = arith.mulf %207, %211 : vector<16x16xf32>
    %213 = arith.truncf %212 : vector<16x16xf32> to vector<16x16xbf16>
    %cst_89 = arith.constant dense<0.000000e+00> : vector<16x8xf32>
    %214 = tpu.matmul %213, %200, %cst_89 {dimension_numbers = #tpu.dot_dimension_numbers<[1], [0], [0], [1], [0, 0, 1, 1], [], []>} : vector<16x16xbf16>, vector<16x8xbf16>, vector<16x8xf32> -> vector<16x8xf32>
    %215 = vector.extract_strided_slice %180 {offsets = [0, 48], sizes = [16, 8], strides = [1, 1]} : vector<16x96xbf16> to vector<16x8xbf16>
    %216 = vector.extract_strided_slice %180 {offsets = [0, 56], sizes = [16, 8], strides = [1, 1]} : vector<16x96xbf16> to vector<16x8xbf16>
    %217 = vector.extract_strided_slice %180 {offsets = [0, 64], sizes = [16, 8], strides = [1, 1]} : vector<16x96xbf16> to vector<16x8xbf16>
    %cst_90 = arith.constant dense<0.000000e+00> : vector<16x16xf32>
    %218 = tpu.matmul %215, %216, %cst_90 {dimension_numbers = #tpu.dot_dimension_numbers<[1], [1], [0], [0], [0, 0, 1, 0], [], []>} : vector<16x8xbf16>, vector<16x8xbf16>, vector<16x16xf32> -> vector<16x16xf32>
    %219 = arith.addf %218, %9 : vector<16x16xf32>
    %cst_91 = arith.constant dense<0xFF800000> : vector<16xf32>
    %220 = vector.multi_reduction <maximumf>, %219, %cst_91 [1] : vector<16x16xf32> to vector<16xf32>
    %221 = vector.shape_cast %220 : vector<16xf32> to vector<16x1xf32>
    %222 = vector.broadcast %221 : vector<16x1xf32> to vector<16x16xf32>
    %223 = arith.subf %219, %222 : vector<16x16xf32>
    %224 = math.exp %223 : vector<16x16xf32>
    %cst_92 = arith.constant dense<0.000000e+00> : vector<16xf32>
    %225 = vector.multi_reduction <add>, %224, %cst_92 [1] : vector<16x16xf32> to vector<16xf32>
    %226 = vector.shape_cast %225 : vector<16xf32> to vector<16x1xf32>
    %227 = tpu.reciprocal %226 {approx = true} : vector<16x1xf32> -> vector<16x1xf32>
    %228 = vector.broadcast %227 : vector<16x1xf32> to vector<16x16xf32>
    %229 = arith.mulf %224, %228 : vector<16x16xf32>
    %230 = arith.truncf %229 : vector<16x16xf32> to vector<16x16xbf16>
    %cst_93 = arith.constant dense<0.000000e+00> : vector<16x8xf32>
    %231 = tpu.matmul %230, %217, %cst_93 {dimension_numbers = #tpu.dot_dimension_numbers<[1], [0], [0], [1], [0, 0, 1, 1], [], []>} : vector<16x16xbf16>, vector<16x8xbf16>, vector<16x8xf32> -> vector<16x8xf32>
    %232 = vector.extract_strided_slice %180 {offsets = [0, 72], sizes = [16, 8], strides = [1, 1]} : vector<16x96xbf16> to vector<16x8xbf16>
    %233 = vector.extract_strided_slice %180 {offsets = [0, 80], sizes = [16, 8], strides = [1, 1]} : vector<16x96xbf16> to vector<16x8xbf16>
    %234 = vector.extract_strided_slice %180 {offsets = [0, 88], sizes = [16, 8], strides = [1, 1]} : vector<16x96xbf16> to vector<16x8xbf16>
    %cst_94 = arith.constant dense<0.000000e+00> : vector<16x16xf32>
    %235 = tpu.matmul %232, %233, %cst_94 {dimension_numbers = #tpu.dot_dimension_numbers<[1], [1], [0], [0], [0, 0, 1, 0], [], []>} : vector<16x8xbf16>, vector<16x8xbf16>, vector<16x16xf32> -> vector<16x16xf32>
    %236 = arith.addf %235, %9 : vector<16x16xf32>
    %cst_95 = arith.constant dense<0xFF800000> : vector<16xf32>
    %237 = vector.multi_reduction <maximumf>, %236, %cst_95 [1] : vector<16x16xf32> to vector<16xf32>
    %238 = vector.shape_cast %237 : vector<16xf32> to vector<16x1xf32>
    %239 = vector.broadcast %238 : vector<16x1xf32> to vector<16x16xf32>
    %240 = arith.subf %236, %239 : vector<16x16xf32>
    %241 = math.exp %240 : vector<16x16xf32>
    %cst_96 = arith.constant dense<0.000000e+00> : vector<16xf32>
    %242 = vector.multi_reduction <add>, %241, %cst_96 [1] : vector<16x16xf32> to vector<16xf32>
    %243 = vector.shape_cast %242 : vector<16xf32> to vector<16x1xf32>
    %244 = tpu.reciprocal %243 {approx = true} : vector<16x1xf32> -> vector<16x1xf32>
    %245 = vector.broadcast %244 : vector<16x1xf32> to vector<16x16xf32>
    %246 = arith.mulf %241, %245 : vector<16x16xf32>
    %247 = arith.truncf %246 : vector<16x16xf32> to vector<16x16xbf16>
    %cst_97 = arith.constant dense<0.000000e+00> : vector<16x8xf32>
    %248 = tpu.matmul %247, %234, %cst_97 {dimension_numbers = #tpu.dot_dimension_numbers<[1], [0], [0], [1], [0, 0, 1, 1], [], []>} : vector<16x16xbf16>, vector<16x8xbf16>, vector<16x8xf32> -> vector<16x8xf32>
    %249 = tpu.concatenate %197, %214, %231, %248 in 1 : vector<16x8xf32>, vector<16x8xf32>, vector<16x8xf32>, vector<16x8xf32> -> vector<16x32xf32>
    %250 = arith.truncf %249 : vector<16x32xf32> to vector<16x32xbf16>
    %c1_98 = arith.constant 1 : index
    %c0_99 = arith.constant 0 : index
    %c0_100 = arith.constant 0 : index
    %251 = vector.load %arg7[%c1_98, %c0_99, %c0_100] : memref<2x32x32xbf16, #tpu.memory_space<vmem>>, vector<1x32x32xbf16>
    %252 = vector.shape_cast %251 : vector<1x32x32xbf16> to vector<32x32xbf16>
    %cst_101 = arith.constant dense<0.000000e+00> : vector<16x32xf32>
    %253 = tpu.matmul %250, %252, %cst_101 {dimension_numbers = #tpu.dot_dimension_numbers<[1], [0], [0], [1], [0, 0, 1, 1], [], []>} : vector<16x32xbf16>, vector<32x32xbf16>, vector<16x32xf32> -> vector<16x32xf32>
    %c1_102 = arith.constant 1 : index
    %c0_103 = arith.constant 0 : index
    %c0_104 = arith.constant 0 : index
    %254 = vector.load %arg8[%c1_102, %c0_103, %c0_104] : memref<2x1x32xf32, #tpu.memory_space<vmem>>, vector<1x1x32xf32>
    %255 = vector.shape_cast %254 : vector<1x1x32xf32> to vector<1x32xf32>
    %256 = vector.broadcast %255 : vector<1x32xf32> to vector<16x32xf32>
    %257 = arith.addf %253, %256 : vector<16x32xf32>
    %258 = arith.addf %257, %171 : vector<16x32xf32>
    %c1_105 = arith.constant 1 : index
    %c0_106 = arith.constant 0 : index
    %c0_107 = arith.constant 0 : index
    %259 = vector.load %arg9[%c1_105, %c0_106, %c0_107] : memref<2x1x32xf32, #tpu.memory_space<vmem>>, vector<1x1x32xf32>
    %260 = vector.shape_cast %259 : vector<1x1x32xf32> to vector<1x32xf32>
    %c1_108 = arith.constant 1 : index
    %c0_109 = arith.constant 0 : index
    %c0_110 = arith.constant 0 : index
    %261 = vector.load %arg10[%c1_108, %c0_109, %c0_110] : memref<2x1x32xf32, #tpu.memory_space<vmem>>, vector<1x1x32xf32>
    %262 = vector.shape_cast %261 : vector<1x1x32xf32> to vector<1x32xf32>
    %cst_111 = arith.constant dense<0.000000e+00> : vector<16xf32>
    %263 = vector.multi_reduction <add>, %258, %cst_111 [1] : vector<16x32xf32> to vector<16xf32>
    %264 = vector.shape_cast %263 : vector<16xf32> to vector<16x1xf32>
    %cst_112 = arith.constant 3.200000e+01 : f32
    %265 = vector.broadcast %cst_112 : f32 to vector<16x1xf32>
    %266 = arith.divf %264, %265 : vector<16x1xf32>
    %267 = vector.broadcast %266 : vector<16x1xf32> to vector<16x32xf32>
    %268 = arith.subf %258, %267 : vector<16x32xf32>
    %269 = vector.broadcast %266 : vector<16x1xf32> to vector<16x32xf32>
    %270 = arith.subf %258, %269 : vector<16x32xf32>
    %271 = arith.mulf %268, %270 : vector<16x32xf32>
    %cst_113 = arith.constant dense<0.000000e+00> : vector<16xf32>
    %272 = vector.multi_reduction <add>, %271, %cst_113 [1] : vector<16x32xf32> to vector<16xf32>
    %273 = vector.shape_cast %272 : vector<16xf32> to vector<16x1xf32>
    %cst_114 = arith.constant 3.200000e+01 : f32
    %274 = vector.broadcast %cst_114 : f32 to vector<16x1xf32>
    %275 = arith.divf %273, %274 : vector<16x1xf32>
    %276 = vector.broadcast %266 : vector<16x1xf32> to vector<16x32xf32>
    %277 = arith.subf %258, %276 : vector<16x32xf32>
    %cst_115 = arith.constant 9.99999974E-6 : f32
    %278 = vector.broadcast %cst_115 : f32 to vector<16x1xf32>
    %279 = arith.addf %275, %278 : vector<16x1xf32>
    %280 = math.rsqrt %279 : vector<16x1xf32>
    %281 = vector.broadcast %280 : vector<16x1xf32> to vector<16x32xf32>
    %282 = arith.mulf %277, %281 : vector<16x32xf32>
    %283 = vector.broadcast %260 : vector<1x32xf32> to vector<16x32xf32>
    %284 = arith.mulf %282, %283 : vector<16x32xf32>
    %285 = vector.broadcast %262 : vector<1x32xf32> to vector<16x32xf32>
    %286 = arith.addf %284, %285 : vector<16x32xf32>
    %287 = arith.truncf %286 : vector<16x32xf32> to vector<16x32xbf16>
    %c1_116 = arith.constant 1 : index
    %c0_117 = arith.constant 0 : index
    %c0_118 = arith.constant 0 : index
    %288 = vector.load %arg11[%c1_116, %c0_117, %c0_118] : memref<2x32x64xbf16, #tpu.memory_space<vmem>>, vector<1x32x64xbf16>
    %289 = vector.shape_cast %288 : vector<1x32x64xbf16> to vector<32x64xbf16>
    %cst_119 = arith.constant dense<0.000000e+00> : vector<16x64xf32>
    %290 = tpu.matmul %287, %289, %cst_119 {dimension_numbers = #tpu.dot_dimension_numbers<[1], [0], [0], [1], [0, 0, 1, 1], [], []>} : vector<16x32xbf16>, vector<32x64xbf16>, vector<16x64xf32> -> vector<16x64xf32>
    %c1_120 = arith.constant 1 : index
    %c0_121 = arith.constant 0 : index
    %c0_122 = arith.constant 0 : index
    %291 = vector.load %arg12[%c1_120, %c0_121, %c0_122] : memref<2x1x64xf32, #tpu.memory_space<vmem>>, vector<1x1x64xf32>
    %292 = vector.shape_cast %291 : vector<1x1x64xf32> to vector<1x64xf32>
    %293 = vector.broadcast %292 : vector<1x64xf32> to vector<16x64xf32>
    %294 = arith.addf %290, %293 : vector<16x64xf32>
    %cst_123 = arith.constant 0.000000e+00 : f32
    %295 = vector.broadcast %cst_123 : f32 to vector<16x64xf32>
    %296 = arith.maximumf %294, %295 : vector<16x64xf32>
    %297 = arith.truncf %296 : vector<16x64xf32> to vector<16x64xbf16>
    %c1_124 = arith.constant 1 : index
    %c0_125 = arith.constant 0 : index
    %c0_126 = arith.constant 0 : index
    %298 = vector.load %arg13[%c1_124, %c0_125, %c0_126] : memref<2x64x32xbf16, #tpu.memory_space<vmem>>, vector<1x64x32xbf16>
    %299 = vector.shape_cast %298 : vector<1x64x32xbf16> to vector<64x32xbf16>
    %cst_127 = arith.constant dense<0.000000e+00> : vector<16x32xf32>
    %300 = tpu.matmul %297, %299, %cst_127 {dimension_numbers = #tpu.dot_dimension_numbers<[1], [0], [0], [1], [0, 0, 1, 1], [], []>} : vector<16x64xbf16>, vector<64x32xbf16>, vector<16x32xf32> -> vector<16x32xf32>
    %c1_128 = arith.constant 1 : index
    %c0_129 = arith.constant 0 : index
    %c0_130 = arith.constant 0 : index
    %301 = vector.load %arg14[%c1_128, %c0_129, %c0_130] : memref<2x1x32xf32, #tpu.memory_space<vmem>>, vector<1x1x32xf32>
    %302 = vector.shape_cast %301 : vector<1x1x32xf32> to vector<1x32xf32>
    %303 = vector.broadcast %302 : vector<1x32xf32> to vector<16x32xf32>
    %304 = arith.addf %300, %303 : vector<16x32xf32>
    %305 = arith.addf %304, %286 : vector<16x32xf32>
    %c1_131 = arith.constant 1 : index
    %c0_132 = arith.constant 0 : index
    %c0_133 = arith.constant 0 : index
    %306 = vector.load %arg15[%c1_131, %c0_132, %c0_133] : memref<2x1x32xf32, #tpu.memory_space<vmem>>, vector<1x1x32xf32>
    %307 = vector.shape_cast %306 : vector<1x1x32xf32> to vector<1x32xf32>
    %c1_134 = arith.constant 1 : index
    %c0_135 = arith.constant 0 : index
    %c0_136 = arith.constant 0 : index
    %308 = vector.load %arg16[%c1_134, %c0_135, %c0_136] : memref<2x1x32xf32, #tpu.memory_space<vmem>>, vector<1x1x32xf32>
    %309 = vector.shape_cast %308 : vector<1x1x32xf32> to vector<1x32xf32>
    %cst_137 = arith.constant dense<0.000000e+00> : vector<16xf32>
    %310 = vector.multi_reduction <add>, %305, %cst_137 [1] : vector<16x32xf32> to vector<16xf32>
    %311 = vector.shape_cast %310 : vector<16xf32> to vector<16x1xf32>
    %cst_138 = arith.constant 3.200000e+01 : f32
    %312 = vector.broadcast %cst_138 : f32 to vector<16x1xf32>
    %313 = arith.divf %311, %312 : vector<16x1xf32>
    %314 = vector.broadcast %313 : vector<16x1xf32> to vector<16x32xf32>
    %315 = arith.subf %305, %314 : vector<16x32xf32>
    %316 = vector.broadcast %313 : vector<16x1xf32> to vector<16x32xf32>
    %317 = arith.subf %305, %316 : vector<16x32xf32>
    %318 = arith.mulf %315, %317 : vector<16x32xf32>
    %cst_139 = arith.constant dense<0.000000e+00> : vector<16xf32>
    %319 = vector.multi_reduction <add>, %318, %cst_139 [1] : vector<16x32xf32> to vector<16xf32>
    %320 = vector.shape_cast %319 : vector<16xf32> to vector<16x1xf32>
    %cst_140 = arith.constant 3.200000e+01 : f32
    %321 = vector.broadcast %cst_140 : f32 to vector<16x1xf32>
    %322 = arith.divf %320, %321 : vector<16x1xf32>
    %323 = vector.broadcast %313 : vector<16x1xf32> to vector<16x32xf32>
    %324 = arith.subf %305, %323 : vector<16x32xf32>
    %cst_141 = arith.constant 9.99999974E-6 : f32
    %325 = vector.broadcast %cst_141 : f32 to vector<16x1xf32>
    %326 = arith.addf %322, %325 : vector<16x1xf32>
    %327 = math.rsqrt %326 : vector<16x1xf32>
    %328 = vector.broadcast %327 : vector<16x1xf32> to vector<16x32xf32>
    %329 = arith.mulf %324, %328 : vector<16x32xf32>
    %330 = vector.broadcast %307 : vector<1x32xf32> to vector<16x32xf32>
    %331 = arith.mulf %329, %330 : vector<16x32xf32>
    %332 = vector.broadcast %309 : vector<1x32xf32> to vector<16x32xf32>
    %333 = arith.addf %331, %332 : vector<16x32xf32>
    %c0_142 = arith.constant 0 : index
    %c0_143 = arith.constant 0 : index
    %334 = vector.load %arg17[%c0_142, %c0_143] : memref<16x32xf32, #tpu.memory_space<vmem>>, vector<16x32xf32>
    tpu.vector_store %arg17[%c0_142, %c0_143], %333 {strides = array<i32>} : memref<16x32xf32, #tpu.memory_space<vmem>>, vector<16x32xf32>,
    return
  }
}

</mosaic_0001>

<llo_original>
// kernel: tpu_custom_call.1
$region0: #{tpu_custom_call.1}
  #allocation0 [shape = 'u32[]', space=smem, size = 0x4, offset = 0x4, fixed_abs, tag = 'smem constant byte address 0x4 - core index']
  #allocation1 [shape = 'u32[72,128]{1,0:T(1,128)}', space=vmem, size = 0x9000, scoped, tag = 'internal scratch']
  %s0 = inlined_call_operand.hbm [shape: f32[16,16], index: 0, kind: input, shape index: {}]
  %s1 = inlined_call_operand.hbm [shape: bf16[16,32], index: 1, kind: input, shape index: {}]
  %s2 = inlined_call_operand.vmem [shape: f32[1,32], index: 2, kind: input, shape index: {}]
  %s3 = inlined_call_operand.hbm [shape: f32[16,32], index: 3, kind: input, shape index: {}]
  %s4 = inlined_call_operand.hbm [shape: f32[16,16], index: 4, kind: input, shape index: {}]
  %s5 = inlined_call_operand.vmem [shape: bf16[2,32,96], index: 5, kind: input, shape index: {}]
  %s6 = inlined_call_operand.vmem [shape: f32[2,1,96], index: 6, kind: input, shape index: {}]
  %s7 = inlined_call_operand.vmem [shape: bf16[2,32,32], index: 7, kind: input, shape index: {}]
  %s8 = inlined_call_operand.vmem [shape: f32[2,1,32], index: 8, kind: input, shape index: {}]
  %s9 = inlined_call_operand.vmem [shape: f32[2,1,32], index: 9, kind: input, shape index: {}]
  %s10 = inlined_call_operand.vmem [shape: f32[2,1,32], index: 10, kind: input, shape index: {}]
  %s11 = inlined_call_operand.vmem [shape: bf16[2,32,64], index: 11, kind: input, shape index: {}]
  %s12 = inlined_call_operand.vmem [shape: f32[2,1,64], index: 12, kind: input, shape index: {}]
  %s13 = inlined_call_operand.vmem [shape: bf16[2,64,32], index: 13, kind: input, shape index: {}]
  %s14 = inlined_call_operand.vmem [shape: f32[2,1,32], index: 14, kind: input, shape index: {}]
  %s15 = inlined_call_operand.hbm [shape: f32[2,1,32], index: 15, kind: input, shape index: {}]
  %s16 = inlined_call_operand.vmem [shape: f32[2,1,32], index: 16, kind: input, shape index: {}]
  %s17 = inlined_call_operand.hbm [shape: f32[16,32], index: 17, kind: output, shape index: {}]
  %s18 = sld [smem:[#allocation0]]
  $region98: #{tpu_custom_call.1} parent=0
    _
  %s20 = ssub.s32 1, %s18
  %s21 = scalar_select 0, %s20, %s18
  $region1: #{tpu_custom_call.1} parent=0
    #allocation2 [shape = 'u8[8192]{0}', space=vmem, size = 0x2000, scoped, tag = 'input window, operand 0, single buffered']
    #allocation3 [shape = 's32[1]{0}', space=sflag, size = 0x4, scoped, tag = 'scoped memory for tpu_custom_call.1']
    #allocation4 [shape = 's32[1]{0}', space=sflag, size = 0x4, scoped, tag = 'scoped memory for tpu_custom_call.1']
    #allocation5 [shape = 'u8[4096]{0}', space=vmem, size = 0x1000, scoped, tag = 'input window, operand 1, single buffered']
    #allocation6 [shape = 's32[1]{0}', space=sflag, size = 0x4, scoped, tag = 'scoped memory for tpu_custom_call.1']
    #allocation7 [shape = 'u8[8192]{0}', space=vmem, size = 0x2000, scoped, tag = 'input window, operand 3, single buffered']
    #allocation8 [shape = 'u8[8192]{0}', space=vmem, size = 0x2000, scoped, tag = 'input window, operand 4, single buffered']
    #allocation9 [shape = 's32[1]{0}', space=sflag, size = 0x4, scoped, tag = 'scoped memory for tpu_custom_call.1']
    #allocation10 [shape = 'u8[1024]{0}', space=vmem, size = 0x400, scoped, tag = 'input window, operand 15, single buffered']
    #allocation11 [shape = 'u8[8192]{0}', space=vmem, size = 0x2000, scoped, tag = 'output window, operand 0, single buffered']
    %22 = vsyncpa [#allocation3], 0
    %23 = vsyncpa [#allocation6], 0
    %24 = vsyncpa [#allocation9], 0
    %25 = vsyncpa [#allocation4], 0
    // Predicated region
    $region2: #{tpu_custom_call.1} parent=1 // pred_check
      _
    $region3: #{tpu_custom_call.1} parent=1 // pred_check_branch
      %27 = sbr.rel (0) target = $region5
    $region4: #{tpu_custom_call.1} parent=1 // pred_region
      %29 = vsyncadd [#allocation3], 0
      %s30 = sshll.u32 %s0, 4
      %s31 = int_to_ptr.hbm [resolvable:$true] %s30
      %s32 = sshll.u32 [#allocation2], 4
      %s33 = int_to_ptr.vmem [resolvable:$true] %s32
      %38 = dma.hbm_to_vmem [thread:$0]  %s31, 256, %s33, [#allocation3], 128, 128, 8
    $region5: #{tpu_custom_call.1} parent=1 // pred_fallthru
      _
    // Predicated region
    $region6: #{tpu_custom_call.1} parent=1 // pred_check
      _
    $region7: #{tpu_custom_call.1} parent=1 // pred_check_branch
      %40 = sbr.rel (0) target = $region9
    $region8: #{tpu_custom_call.1} parent=1 // pred_region
      %42 = vsyncadd [#allocation6], 0
      %s43 = sshll.u32 %s1, 4
      %s44 = int_to_ptr.hbm [resolvable:$true] %s43
      %s45 = sshll.u32 [#allocation5], 4
      %s46 = int_to_ptr.vmem [resolvable:$true] %s45
      %51 = dma.hbm_to_vmem [thread:$0]  %s44, 128, %s46, [#allocation6], 64, 64, 4
    $region9: #{tpu_custom_call.1} parent=1 // pred_fallthru
      _
    // Predicated region
    $region10: #{tpu_custom_call.1} parent=1 // pred_check
      _
    $region11: #{tpu_custom_call.1} parent=1 // pred_check_branch
      %53 = sbr.rel (0) target = $region13
    $region12: #{tpu_custom_call.1} parent=1 // pred_region
      _
    $region13: #{tpu_custom_call.1} parent=1 // pred_fallthru
      _
    // Predicated region
    $region14: #{tpu_custom_call.1} parent=1 // pred_check
      _
    $region15: #{tpu_custom_call.1} parent=1 // pred_check_branch
      %55 = sbr.rel (0) target = $region17
    $region16: #{tpu_custom_call.1} parent=1 // pred_region
      %57 = vsyncadd [#allocation6], 0
      %s58 = sshll.u32 %s3, 4
      %s59 = int_to_ptr.hbm [resolvable:$true] %s58
      %s60 = sshll.u32 [#allocation7], 4
      %s61 = int_to_ptr.vmem [resolvable:$true] %s60
      %66 = dma.hbm_to_vmem [thread:$0]  %s59, 256, %s61, [#allocation6], 128, 128, 8
    $region17: #{tpu_custom_call.1} parent=1 // pred_fallthru
      _
    // Predicated region
    $region18: #{tpu_custom_call.1} parent=1 // pred_check
      _
    $region19: #{tpu_custom_call.1} parent=1 // pred_check_branch
      %68 = sbr.rel (0) target = $region21
    $region20: #{tpu_custom_call.1} parent=1 // pred_region
      %70 = vsyncadd [#allocation9], 0
      %s71 = sshll.u32 %s4, 4
      %s72 = int_to_ptr.hbm [resolvable:$true] %s71
      %s73 = sshll.u32 [#allocation8], 4
      %s74 = int_to_ptr.vmem [resolvable:$true] %s73
      %79 = dma.hbm_to_vmem [thread:$0]  %s72, 256, %s74, [#allocation9], 128, 128, 8
    $region21: #{tpu_custom_call.1} parent=1 // pred_fallthru
      _
    // Predicated region
    $region22: #{tpu_custom_call.1} parent=1 // pred_check
      _
    $region23: #{tpu_custom_call.1} parent=1 // pred_check_branch
      %81 = sbr.rel (0) target = $region25
    $region24: #{tpu_custom_call.1} parent=1 // pred_region
      _
    $region25: #{tpu_custom_call.1} parent=1 // pred_fallthru
      _
    // Predicated region
    $region26: #{tpu_custom_call.1} parent=1 // pred_check
      _
    $region27: #{tpu_custom_call.1} parent=1 // pred_check_branch
      %83 = sbr.rel (0) target = $region29
    $region28: #{tpu_custom_call.1} parent=1 // pred_region
      _
    $region29: #{tpu_custom_call.1} parent=1 // pred_fallthru
      _
    // Predicated region
    $region30: #{tpu_custom_call.1} parent=1 // pred_check
      _
    $region31: #{tpu_custom_call.1} parent=1 // pred_check_branch
      %85 = sbr.rel (0) target = $region33
    $region32: #{tpu_custom_call.1} parent=1 // pred_region
      _
    $region33: #{tpu_custom_call.1} parent=1 // pred_fallthru
      _
    // Predicated region
    $region34: #{tpu_custom_call.1} parent=1 // pred_check
      _
    $region35: #{tpu_custom_call.1} parent=1 // pred_check_branch
      %87 = sbr.rel (0) target = $region37
    $region36: #{tpu_custom_call.1} parent=1 // pred_region
      _
    $region37: #{tpu_custom_call.1} parent=1 // pred_fallthru
      _
    // Predicated region
    $region38: #{tpu_custom_call.1} parent=1 // pred_check
      _
    $region39: #{tpu_custom_call.1} parent=1 // pred_check_branch
      %89 = sbr.rel (0) target = $region41
    $region40: #{tpu_custom_call.1} parent=1 // pred_region
      _
    $region41: #{tpu_custom_call.1} parent=1 // pred_fallthru
      _
    // Predicated region
    $region42: #{tpu_custom_call.1} parent=1 // pred_check
      _
    $region43: #{tpu_custom_call.1} parent=1 // pred_check_branch
      %91 = sbr.rel (0) target = $region45
    $region44: #{tpu_custom_call.1} parent=1 // pred_region
      _
    $region45: #{tpu_custom_call.1} parent=1 // pred_fallthru
      _
    // Predicated region
    $region46: #{tpu_custom_call.1} parent=1 // pred_check
      _
    $region47: #{tpu_custom_call.1} parent=1 // pred_check_branch
      %93 = sbr.rel (0) target = $region49
    $region48: #{tpu_custom_call.1} parent=1 // pred_region
      _
    $region49: #{tpu_custom_call.1} parent=1 // pred_fallthru
      _
    // Predicated region
    $region50: #{tpu_custom_call.1} parent=1 // pred_check
      _
    $region51: #{tpu_custom_call.1} parent=1 // pred_check_branch
      %95 = sbr.rel (0) target = $region53
    $region52: #{tpu_custom_call.1} parent=1 // pred_region
      _
    $region53: #{tpu_custom_call.1} parent=1 // pred_fallthru
      _
    // Predicated region
    $region54: #{tpu_custom_call.1} parent=1 // pred_check
      _
    $region55: #{tpu_custom_call.1} parent=1 // pred_check_branch
      %97 = sbr.rel (0) target = $region57
    $region56: #{tpu_custom_call.1} parent=1 // pred_region
      _
    $region57: #{tpu_custom_call.1} parent=1 // pred_fallthru
      _
    // Predicated region
    $region58: #{tpu_custom_call.1} parent=1 // pred_check
      _
    $region59: #{tpu_custom_call.1} parent=1 // pred_check_branch
      %99 = sbr.rel (0) target = $region61
    $region60: #{tpu_custom_call.1} parent=1 // pred_region
      _
    $region61: #{tpu_custom_call.1} parent=1 // pred_fallthru
      _
    // Predicated region
    $region62: #{tpu_custom_call.1} parent=1 // pred_check
      _
    $region63: #{tpu_custom_call.1} parent=1 // pred_check_branch
      %101 = sbr.rel (0) target = $region65
    $region64: #{tpu_custom_call.1} parent=1 // pred_region
      %103 = vsyncadd [#allocation9], 0
      %s104 = sshll.u32 %s15, 4
      %s105 = int_to_ptr.hbm [resolvable:$true] %s104
      %s106 = sshll.u32 [#allocation10], 4
      %s107 = int_to_ptr.vmem [resolvable:$true] %s106
      %112 = dma.hbm_to_vmem [thread:$0]  %s105, 32, %s107, [#allocation9], 16, 16, 1
    $region65: #{tpu_custom_call.1} parent=1 // pred_fallthru
      _
    // Predicated region
    $region66: #{tpu_custom_call.1} parent=1 // pred_check
      _
    $region67: #{tpu_custom_call.1} parent=1 // pred_check_branch
      %114 = sbr.rel (0) target = $region69
    $region68: #{tpu_custom_call.1} parent=1 // pred_region
      _
    $region69: #{tpu_custom_call.1} parent=1 // pred_fallthru
      _
    // Predicated region
    $region70: #{tpu_custom_call.1} parent=1 // pred_check
      _
    $region71: #{tpu_custom_call.1} parent=1 // pred_check_branch
      %116 = sbr.rel (0) target = $region73
    $region72: #{tpu_custom_call.1} parent=1 // pred_region
      %118 = dma.done [#allocation3], 256
    $region73: #{tpu_custom_call.1} parent=1 // pred_fallthru
      _
    // Predicated region
    $region74: #{tpu_custom_call.1} parent=1 // pred_check
      _
    $region75: #{tpu_custom_call.1} parent=1 // pred_check_branch
      %120 = sbr.rel (0) target = $region77
    $region76: #{tpu_custom_call.1} parent=1 // pred_region
      %122 = dma.done [#allocation6], 128
    $region77: #{tpu_custom_call.1} parent=1 // pred_fallthru
      _
    // Predicated region
    $region78: #{tpu_custom_call.1} parent=1 // pred_check
      _
    $region79: #{tpu_custom_call.1} parent=1 // pred_check_branch
      %124 = sbr.rel (0) target = $region81
    $region80: #{tpu_custom_call.1} parent=1 // pred_region
      %126 = dma.done [#allocation6], 256
    $region81: #{tpu_custom_call.1} parent=1 // pred_fallthru
      _
    // Predicated region
    $region82: #{tpu_custom_call.1} parent=1 // pred_check
      _
    $region83: #{tpu_custom_call.1} parent=1 // pred_check_branch
      %128 = sbr.rel (0) target = $region85
    $region84: #{tpu_custom_call.1} parent=1 // pred_region
      %130 = dma.done [#allocation9], 256
    $region85: #{tpu_custom_call.1} parent=1 // pred_fallthru
      _
    // Predicated region
    $region86: #{tpu_custom_call.1} parent=1 // pred_check
      _
    $region87: #{tpu_custom_call.1} parent=1 // pred_check_branch
      %132 = sbr.rel (0) target = $region89
    $region88: #{tpu_custom_call.1} parent=1 // pred_region
      %134 = dma.done [#allocation9], 32
    $region89: #{tpu_custom_call.1} parent=1 // pred_fallthru
      _
    %v136 = vld [vmem:[#allocation2] sm:$0xff]
    %v137 = vld [vmem:[#allocation2 + $0x8] sm:$0xff]
    %v138 = vpack.c.bf16 %v137, %v136
    %v139 = vld [vmem:[#allocation5] sm:$0xf]
    %v140 = vld [vmem:[#allocation5 + $0x4] sm:$0xf]
    %v141 = vld [vmem:[%s2] sm:$0x1]
    %v143 = vperm.slane %v141, 0
    %v147 = vunpack.c.l.b16 %v139
    %v148 = vunpack.c.l.b16 %v140
    %v149 = vpack.c.b16 %v148, %v147
    %vm151 = vcmask 130048
    %v153 = vsel %vm151, %v138, 0
    %155 = vmatpush.bf16.msra.mxu0 0
    %156 = vmatpush.bf16.msra.mxu0 0
    %157 = vmatpush.bf16.msra.mxu0 0
    %158 = vmatpush.bf16.msra.mxu0 0
    %159 = vmatpush.bf16.msra.mxu0 0
    %160 = vmatpush.bf16.msra.mxu0 0
    %161 = vmatpush.bf16.msra.mxu0 0
    %162 = vmatpush.bf16.msra.mxu0 %v149
    %163 = vmatmul.bf16.gmra.mxu0 %v153
    %v164 = vpop.f32.mrf.mxu0
    %v165 = vadd.f32 %v143, %v164
    %v166 = vpop.f32.mrf.mxu0
    %v167 = vadd.f32 %v143, %v166
    %168 = vdwg.mxu0
    %v169 = vld [vmem:[#allocation7] sm:$0xff]
    %v170 = vld [vmem:[#allocation7 + $0x8] sm:$0xff]
    %v171 = vadd.f32 %v165, %v169
    %v172 = vadd.f32 %v167, %v170
    %v173 = vld [vmem:[#allocation8] sm:$0xff]
    %v174 = vld [vmem:[#allocation8 + $0x8] sm:$0xff]
    %v175 = vpack.c.bf16 %v172, %v171
    %v176 = vld [vmem:[%s5] sm:$0xf]
    %v177 = vld [vmem:[%s5 + $0x4] sm:$0xf]
    %v178 = vld [vmem:[%s5 + $0x8] sm:$0xf]
    %v179 = vld [vmem:[%s5 + $0xc] sm:$0xf]
    %v180 = vld [vmem:[%s6] sm:$0x1]
    %v182 = vperm.slane %v180, 0
    %v188 = vunpack.c.l.b16 %v176
    %v189 = vunpack.c.l.b16 %v177
    %v190 = vunpack.c.l.b16 %v178
    %v191 = vunpack.c.l.b16 %v179
    %v192 = vpack.c.b16 %v189, %v188
    %v193 = vpack.c.b16 %v191, %v190
    %vm196 = vcmask 261120
    %v198 = vsel %vm196, %v175, 0
    %200 = vmatpush.bf16.msra.mxu0 0
    %201 = vmatpush.bf16.msra.mxu0 0
    %202 = vmatpush.bf16.msra.mxu0 0
    %203 = vmatpush.bf16.msra.mxu0 0
    %204 = vmatpush.bf16.msra.mxu0 0
    %205 = vmatpush.bf16.msra.mxu0 0
    %206 = vmatpush.bf16.msra.mxu0 %v193
    %207 = vmatpush.bf16.msra.mxu0 %v192
    %208 = vmatmul.bf16.gmra.mxu0 %v198
    %v209 = vpop.f32.mrf.mxu0
    %v210 = vadd.f32 %v182, %v209
    %v211 = vpop.f32.mrf.mxu0
    %v212 = vadd.f32 %v182, %v211
    %213 = vdwg.mxu0
    %v214 = vpack.c.bf16 %v210, %v210
    %v215 = vpack.c.bf16 %v212, %v212
    %v218 = vunpack.c.l.b16 %v214
    %v219 = vunpack.c.l.b16 %v215
    %v220 = vpack.c.b16 %v219, %v218
    %221 = vrot.lane.b32.xlu0 %v220, 120
    %v222 = vpop.permute.xlu0 %221
    %vm223 = vcmask 64512
    %v225 = vsel %vm223, %v220, 0
    %v228 = vsel %vm223, %v222, 0
    %230 = vmatpush.bf16.xpose.msra.mxu0 0
    %231 = vmatpush.bf16.xpose.msra.mxu0 0
    %232 = vmatpush.bf16.xpose.msra.mxu0 0
    %233 = vmatpush.bf16.xpose.msra.mxu0 0
    %234 = vmatpush.bf16.xpose.msra.mxu0 0
    %235 = vmatpush.bf16.xpose.msra.mxu0 0
    %236 = vmatpush.bf16.xpose.msra.mxu0 0
    %237 = vmatpush.bf16.xpose.msra.mxu0 %v228
    %238 = vmatmul.bf16.gmra.mxu0 %v225
    %v239 = vpop.f32.mrf.mxu0
    %v240 = vadd.f32 %v173, %v239
    %v241 = vpop.f32.mrf.mxu0
    %v242 = vadd.f32 %v174, %v241
    %243 = vdwg.mxu0
    %v244 = vsel %vm151, %v240, -inf
    %245 = vmax.xlane.f32.xlu0 %v244
    %v246 = vpop.xlane.xlu0 %245
    %v247 = vsel %vm151, %v242, -inf
    %248 = vmax.xlane.f32.xlu0 %v247
    %v249 = vpop.xlane.xlu0 %248
    %v250 = vsub.f32 %v240, %v246
    %v251 = vsub.f32 %v242, %v249
    %v252 = vmul.f32 %v250, 1.442695
    %v253 = vpow.pop %v252
    %v254 = vmul.f32 %v251, 1.442695
    %v255 = vpow.pop %v254
    %v256 = vsel %vm151, %v253, 0.0
    %257 = vadd.xlane.f32.xlu0 %v256
    %v258 = vpop.xlane.xlu0 %257
    %v259 = vsel %vm151, %v255, 0.0
    %260 = vadd.xlane.f32.xlu0 %v259
    %v261 = vpop.xlane.xlu0 %260
    %v262 = vrcp.pop %v258
    %v263 = vrcp.pop %v261
    %v264 = vmul.f32 %v253, %v262
    %v265 = vmul.f32 %v255, %v263
    %v266 = vpack.c.bf16 %v265, %v264
    %267 = vrot.lane.b32.xlu0 %v220, 112
    %v268 = vpop.permute.xlu0 %267
    %v271 = vsel %vm151, %v266, 0
    %273 = vmatpush.bf16.msra.mxu0 0
    %274 = vmatpush.bf16.msra.mxu0 0
    %275 = vmatpush.bf16.msra.mxu0 0
    %276 = vmatpush.bf16.msra.mxu0 0
    %277 = vmatpush.bf16.msra.mxu0 0
    %278 = vmatpush.bf16.msra.mxu0 0
    %279 = vmatpush.bf16.msra.mxu0 0
    %280 = vmatpush.bf16.msra.mxu0 %v268
    %281 = vmatmul.bf16.gmra.mxu0 %v271
    %v282 = vpop.f32.mrf.mxu0
    %v283 = vadd.f32 0.0, %v282
    %v284 = vpop.f32.mrf.mxu0
    %v285 = vadd.f32 0.0, %v284
    %286 = vdwg.mxu0
    %287 = vrot.lane.b32.xlu0 %v220, 104
    %v288 = vpop.permute.xlu0 %287
    %289 = vrot.lane.b32.xlu0 %v220, 96
    %v290 = vpop.permute.xlu0 %289
    %v292 = vsel %vm223, %v288, 0
    %v295 = vsel %vm223, %v290, 0
    %297 = vmatpush.bf16.xpose.msra.mxu0 0
    %298 = vmatpush.bf16.xpose.msra.mxu0 0
    %299 = vmatpush.bf16.xpose.msra.mxu0 0
    %300 = vmatpush.bf16.xpose.msra.mxu0 0
    %301 = vmatpush.bf16.xpose.msra.mxu0 0
    %302 = vmatpush.bf16.xpose.msra.mxu0 0
    %303 = vmatpush.bf16.xpose.msra.mxu0 0
    %304 = vmatpush.bf16.xpose.msra.mxu0 %v295
    %305 = vmatmul.bf16.gmra.mxu0 %v292
    %v306 = vpop.f32.mrf.mxu0
    %v307 = vadd.f32 %v173, %v306
    %v308 = vpop.f32.mrf.mxu0
    %v309 = vadd.f32 %v174, %v308
    %310 = vdwg.mxu0
    %v311 = vsel %vm151, %v307, -inf
    %312 = vmax.xlane.f32.xlu0 %v311
    %v313 = vpop.xlane.xlu0 %312
    %v314 = vsel %vm151, %v309, -inf
    %315 = vmax.xlane.f32.xlu0 %v314
    %v316 = vpop.xlane.xlu0 %315
    %v317 = vsub.f32 %v307, %v313
    %v318 = vsub.f32 %v309, %v316
    %v319 = vmul.f32 %v317, 1.442695
    %v320 = vpow.pop %v319
    %v321 = vmul.f32 %v318, 1.442695
    %v322 = vpow.pop %v321
    %v323 = vsel %vm151, %v320, 0.0
    %324 = vadd.xlane.f32.xlu0 %v323
    %v325 = vpop.xlane.xlu0 %324
    %v326 = vsel %vm151, %v322, 0.0
    %327 = vadd.xlane.f32.xlu0 %v326
    %v328 = vpop.xlane.xlu0 %327
    %v329 = vrcp.pop %v325
    %v330 = vrcp.pop %v328
    %v331 = vmul.f32 %v320, %v329
    %v332 = vmul.f32 %v322, %v330
    %v333 = vpack.c.bf16 %v332, %v331
    %334 = vrot.lane.b32.xlu0 %v220, 88
    %v335 = vpop.permute.xlu0 %334
    %v338 = vsel %vm151, %v333, 0
    %340 = vmatpush.bf16.msra.mxu0 0
    %341 = vmatpush.bf16.msra.mxu0 0
    %342 = vmatpush.bf16.msra.mxu0 0
    %343 = vmatpush.bf16.msra.mxu0 0
    %344 = vmatpush.bf16.msra.mxu0 0
    %345 = vmatpush.bf16.msra.mxu0 0
    %346 = vmatpush.bf16.msra.mxu0 0
    %347 = vmatpush.bf16.msra.mxu0 %v335
    %348 = vmatmul.bf16.gmra.mxu0 %v338
    %v349 = vpop.f32.mrf.mxu0
    %v350 = vadd.f32 0.0, %v349
    %v351 = vpop.f32.mrf.mxu0
    %v352 = vadd.f32 0.0, %v351
    %353 = vdwg.mxu0
    %354 = vrot.lane.b32.xlu0 %v220, 80
    %v355 = vpop.permute.xlu0 %354
    %356 = vrot.lane.b32.xlu0 %v220, 72
    %v357 = vpop.permute.xlu0 %356
    %v359 = vsel %vm223, %v355, 0
    %v362 = vsel %vm223, %v357, 0
    %364 = vmatpush.bf16.xpose.msra.mxu0 0
    %365 = vmatpush.bf16.xpose.msra.mxu0 0
    %366 = vmatpush.bf16.xpose.msra.mxu0 0
    %367 = vmatpush.bf16.xpose.msra.mxu0 0
    %368 = vmatpush.bf16.xpose.msra.mxu0 0
    %369 = vmatpush.bf16.xpose.msra.mxu0 0
    %370 = vmatpush.bf16.xpose.msra.mxu0 0
    %371 = vmatpush.bf16.xpose.msra.mxu0 %v362
    %372 = vmatmul.bf16.gmra.mxu0 %v359
    %v373 = vpop.f32.mrf.mxu0
    %v374 = vadd.f32 %v173, %v373
    %v375 = vpop.f32.mrf.mxu0
    %v376 = vadd.f32 %v174, %v375
    %377 = vdwg.mxu0
    %v378 = vsel %vm151, %v374, -inf
    %379 = vmax.xlane.f32.xlu0 %v378
    %v380 = vpop.xlane.xlu0 %379
    %v381 = vsel %vm151, %v376, -inf
    %382 = vmax.xlane.f32.xlu0 %v381
    %v383 = vpop.xlane.xlu0 %382
    %v384 = vsub.f32 %v374, %v380
    %v385 = vsub.f32 %v376, %v383
    %v386 = vmul.f32 %v384, 1.442695
    %v387 = vpow.pop %v386
    %v388 = vmul.f32 %v385, 1.442695
    %v389 = vpow.pop %v388
    %v390 = vsel %vm151, %v387, 0.0
    %391 = vadd.xlane.f32.xlu0 %v390
    %v392 = vpop.xlane.xlu0 %391
    %v393 = vsel %vm151, %v389, 0.0
    %394 = vadd.xlane.f32.xlu0 %v393
    %v395 = vpop.xlane.xlu0 %394
    %v396 = vrcp.pop %v392
    %v397 = vrcp.pop %v395
    %v398 = vmul.f32 %v387, %v396
    %v399 = vmul.f32 %v389, %v397
    %v400 = vpack.c.bf16 %v399, %v398
    %401 = vrot.lane.b32.xlu0 %v220, 64
    %v402 = vpop.permute.xlu0 %401
    %v405 = vsel %vm151, %v400, 0
    %407 = vmatpush.bf16.msra.mxu0 0
    %408 = vmatpush.bf16.msra.mxu0 0
    %409 = vmatpush.bf16.msra.mxu0 0
    %410 = vmatpush.bf16.msra.mxu0 0
    %411 = vmatpush.bf16.msra.mxu0 0
    %412 = vmatpush.bf16.msra.mxu0 0
    %413 = vmatpush.bf16.msra.mxu0 0
    %414 = vmatpush.bf16.msra.mxu0 %v402
    %415 = vmatmul.bf16.gmra.mxu0 %v405
    %v416 = vpop.f32.mrf.mxu0
    %v417 = vadd.f32 0.0, %v416
    %v418 = vpop.f32.mrf.mxu0
    %v419 = vadd.f32 0.0, %v418
    %420 = vdwg.mxu0
    %421 = vrot.lane.b32.xlu0 %v220, 56
    %v422 = vpop.permute.xlu0 %421
    %423 = vrot.lane.b32.xlu0 %v220, 48
    %v424 = vpop.permute.xlu0 %423
    %v426 = vsel %vm223, %v422, 0
    %v429 = vsel %vm223, %v424, 0
    %431 = vmatpush.bf16.xpose.msra.mxu0 0
    %432 = vmatpush.bf16.xpose.msra.mxu0 0
    %433 = vmatpush.bf16.xpose.msra.mxu0 0
    %434 = vmatpush.bf16.xpose.msra.mxu0 0
    %435 = vmatpush.bf16.xpose.msra.mxu0 0
    %436 = vmatpush.bf16.xpose.msra.mxu0 0
    %437 = vmatpush.bf16.xpose.msra.mxu0 0
    %438 = vmatpush.bf16.xpose.msra.mxu0 %v429
    %439 = vmatmul.bf16.gmra.mxu0 %v426
    %v440 = vpop.f32.mrf.mxu0
    %v441 = vadd.f32 %v173, %v440
    %v442 = vpop.f32.mrf.mxu0
    %v443 = vadd.f32 %v174, %v442
    %444 = vdwg.mxu0
    %v445 = vsel %vm151, %v441, -inf
    %446 = vmax.xlane.f32.xlu0 %v445
    %v447 = vpop.xlane.xlu0 %446
    %v448 = vsel %vm151, %v443, -inf
    %449 = vmax.xlane.f32.xlu0 %v448
    %v450 = vpop.xlane.xlu0 %449
    %v451 = vsub.f32 %v441, %v447
    %v452 = vsub.f32 %v443, %v450
    %v453 = vmul.f32 %v451, 1.442695
    %v454 = vpow.pop %v453
    %v455 = vmul.f32 %v452, 1.442695
    %v456 = vpow.pop %v455
    %v457 = vsel %vm151, %v454, 0.0
    %458 = vadd.xlane.f32.xlu0 %v457
    %v459 = vpop.xlane.xlu0 %458
    %v460 = vsel %vm151, %v456, 0.0
    %461 = vadd.xlane.f32.xlu0 %v460
    %v462 = vpop.xlane.xlu0 %461
    %v463 = vrcp.pop %v459
    %v464 = vrcp.pop %v462
    %v465 = vmul.f32 %v454, %v463
    %v466 = vmul.f32 %v456, %v464
    %v467 = vpack.c.bf16 %v466, %v465
    %468 = vrot.lane.b32.xlu0 %v220, 40
    %v469 = vpop.permute.xlu0 %468
    %v472 = vsel %vm151, %v467, 0
    %474 = vmatpush.bf16.msra.mxu0 0
    %475 = vmatpush.bf16.msra.mxu0 0
    %476 = vmatpush.bf16.msra.mxu0 0
    %477 = vmatpush.bf16.msra.mxu0 0
    %478 = vmatpush.bf16.msra.mxu0 0
    %479 = vmatpush.bf16.msra.mxu0 0
    %480 = vmatpush.bf16.msra.mxu0 0
    %481 = vmatpush.bf16.msra.mxu0 %v469
    %482 = vmatmul.bf16.gmra.mxu0 %v472
    %v483 = vpop.f32.mrf.mxu0
    %v484 = vadd.f32 0.0, %v483
    %v485 = vpop.f32.mrf.mxu0
    %v486 = vadd.f32 0.0, %v485
    %487 = vdwg.mxu0
    %490 = vrot.lane.b32.xlu0 %v350, 8
    %v491 = vpop.permute.xlu0 %490
    %492 = vrot.lane.b32.xlu0 %v352, 8
    %v493 = vpop.permute.xlu0 %492
    %498 = vrot.lane.b32.xlu0 %v417, 16
    %v499 = vpop.permute.xlu0 %498
    %500 = vrot.lane.b32.xlu0 %v419, 16
    %v501 = vpop.permute.xlu0 %500
    %506 = vrot.lane.b32.xlu0 %v484, 24
    %v507 = vpop.permute.xlu0 %506
    %508 = vrot.lane.b32.xlu0 %v486, 24
    %v509 = vpop.permute.xlu0 %508
    %v512 = vsel %vm223, %v283, %v491
    %v513 = vsel %vm223, %v285, %v493
    %v514 = vsel %vm151, %v512, %v499
    %v515 = vsel %vm151, %v513, %v501
    %vm516 = vcmask 195584
    %v517 = vsel %vm516, %v514, %v507
    %v518 = vsel %vm516, %v515, %v509
    %v519 = vpack.c.bf16 %v518, %v517
    %v520 = vld [vmem:[%s7] sm:$0xf]
    %v521 = vld [vmem:[%s7 + $0x4] sm:$0xf]
    %v522 = vld [vmem:[%s7 + $0x8] sm:$0xf]
    %v523 = vld [vmem:[%s7 + $0xc] sm:$0xf]
    %v524 = vld [vmem:[%s8] sm:$0x1]
    %v526 = vperm.slane %v524, 0
    %v532 = vunpack.c.l.b16 %v520
    %v533 = vunpack.c.l.b16 %v521
    %v534 = vunpack.c.l.b16 %v522
    %v535 = vunpack.c.l.b16 %v523
    %v536 = vpack.c.b16 %v533, %v532
    %v537 = vpack.c.b16 %v535, %v534
    %v541 = vsel %vm196, %v519, 0
    %543 = vmatpush.bf16.msra.mxu0 0
    %544 = vmatpush.bf16.msra.mxu0 0
    %545 = vmatpush.bf16.msra.mxu0 0
    %546 = vmatpush.bf16.msra.mxu0 0
    %547 = vmatpush.bf16.msra.mxu0 0
    %548 = vmatpush.bf16.msra.mxu0 0
    %549 = vmatpush.bf16.msra.mxu0 %v537
    %550 = vmatpush.bf16.msra.mxu0 %v536
    %551 = vmatmul.bf16.gmra.mxu0 %v541
    %v552 = vpop.f32.mrf.mxu0
    %v553 = vadd.f32 %v526, %v552
    %v554 = vpop.f32.mrf.mxu0
    %v555 = vadd.f32 %v526, %v554
    %556 = vdwg.mxu0
    %v557 = vadd.f32 %v553, %v171
    %v558 = vadd.f32 %v555, %v172
    %v559 = vld [vmem:[%s9] sm:$0x1]
    %v560 = vld [vmem:[%s10] sm:$0x1]
    %v561 = vsel %vm196, %v557, 0.0
    %562 = vadd.xlane.f32.xlu0 %v561
    %v563 = vpop.xlane.xlu0 %562
    %v564 = vsel %vm196, %v558, 0.0
    %565 = vadd.xlane.f32.xlu0 %v564
    %v566 = vpop.xlane.xlu0 %565
    %v567 = vrcp.pop 32.0
    %v568 = vmul.f32 32.0, %v567
    %v569 = vsub.f32 1.0, %v568
    %v570 = vmul.f32 %v567, %v569
    %v571 = vadd.f32 %v567, %v570
    %vm572 = vweird.f32 %v567
    %v573 = vsel %vm572, %v567, %v571
    %v574 = vmul.f32 %v563, %v573
    %v575 = vmul.f32 %v566, %v573
    %v576 = vsub.f32 %v557, %v574
    %v577 = vsub.f32 %v558, %v575
    %v578 = vmul.f32 %v576, %v576
    %v579 = vmul.f32 %v577, %v577
    %v580 = vsel %vm196, %v578, 0.0
    %581 = vadd.xlane.f32.xlu0 %v580
    %v582 = vpop.xlane.xlu0 %581
    %v583 = vsel %vm196, %v579, 0.0
    %584 = vadd.xlane.f32.xlu0 %v583
    %v585 = vpop.xlane.xlu0 %584
    %v586 = vmul.f32 %v582, %v573
    %v587 = vmul.f32 %v585, %v573
    %v588 = vadd.f32 %v586, 1e-05
    %v589 = vadd.f32 %v587, 1e-05
    %v590 = vrsqrt.pop %v588
    %v591 = vmul.f32 %v590, %v588
    %v592 = vmul.f32 %v591, %v590
    %v593 = vmul.f32 0.5, %v592
    %v594 = vsub.f32 1.5, %v593
    %v595 = vmul.f32 %v590, %v594
    %vm596 = vweird.f32 %v588
    %vm597 = vweird.f32 %v590
    %vm598 = vmor %vm596, %vm597
    %v599 = vsel %vm598, %v590, %v595
    %v600 = vrsqrt.pop %v589
    %v601 = vmul.f32 %v600, %v589
    %v602 = vmul.f32 %v601, %v600
    %v603 = vmul.f32 0.5, %v602
    %v604 = vsub.f32 1.5, %v603
    %v605 = vmul.f32 %v600, %v604
    %vm606 = vweird.f32 %v589
    %vm607 = vweird.f32 %v600
    %vm608 = vmor %vm606, %vm607
    %v609 = vsel %vm608, %v600, %v605
    %v610 = vmul.f32 %v576, %v599
    %v611 = vmul.f32 %v577, %v609
    %v613 = vperm.slane %v559, 0
    %v615 = vmul.f32 %v610, %v613
    %v616 = vmul.f32 %v611, %v613
    %v618 = vperm.slane %v560, 0
    %v620 = vadd.f32 %v615, %v618
    %v621 = vadd.f32 %v616, %v618
    %v622 = vpack.c.bf16 %v621, %v620
    %v623 = vld [vmem:[%s11] sm:$0xf]
    %v624 = vld [vmem:[%s11 + $0x4] sm:$0xf]
    %v625 = vld [vmem:[%s11 + $0x8] sm:$0xf]
    %v626 = vld [vmem:[%s11 + $0xc] sm:$0xf]
    %v627 = vld [vmem:[%s12] sm:$0x1]
    %v629 = vperm.slane %v627, 0
    %v635 = vunpack.c.l.b16 %v623
    %v636 = vunpack.c.l.b16 %v624
    %v637 = vunpack.c.l.b16 %v625
    %v638 = vunpack.c.l.b16 %v626
    %v639 = vpack.c.b16 %v636, %v635
    %v640 = vpack.c.b16 %v638, %v637
    %v644 = vsel %vm196, %v622, 0
    %646 = vmatpush.bf16.msra.mxu0 0
    %647 = vmatpush.bf16.msra.mxu0 0
    %648 = vmatpush.bf16.msra.mxu0 0
    %649 = vmatpush.bf16.msra.mxu0 0
    %650 = vmatpush.bf16.msra.mxu0 0
    %651 = vmatpush.bf16.msra.mxu0 0
    %652 = vmatpush.bf16.msra.mxu0 %v640
    %653 = vmatpush.bf16.msra.mxu0 %v639
    %654 = vmatmul.bf16.gmra.mxu0 %v644
    %v655 = vpop.f32.mrf.mxu0
    %v656 = vadd.f32 %v629, %v655
    %v657 = vpop.f32.mrf.mxu0
    %v658 = vadd.f32 %v629, %v657
    %659 = vdwg.mxu0
    %v660 = vmax.f32 %v656, 0.0
    %v661 = vmax.f32 %v658, 0.0
    %v662 = vpack.c.bf16 %v661, %v660
    %v663 = vld [vmem:[%s13] sm:$0xf]
    %v664 = vld [vmem:[%s13 + $0x4] sm:$0xf]
    %v665 = vld [vmem:[%s13 + $0x8] sm:$0xf]
    %v666 = vld [vmem:[%s13 + $0xc] sm:$0xf]
    %v667 = vld [vmem:[%s13 + $0x10] sm:$0xf]
    %v668 = vld [vmem:[%s13 + $0x14] sm:$0xf]
    %v669 = vld [vmem:[%s13 + $0x18] sm:$0xf]
    %v670 = vld [vmem:[%s13 + $0x1c] sm:$0xf]
    %v671 = vld [vmem:[%s14] sm:$0x1]
    %v673 = vperm.slane %v671, 0
    %v683 = vunpack.c.l.b16 %v663
    %v684 = vunpack.c.l.b16 %v664
    %v685 = vunpack.c.l.b16 %v665
    %v686 = vunpack.c.l.b16 %v666
    %v687 = vunpack.c.l.b16 %v667
    %v688 = vunpack.c.l.b16 %v668
    %v689 = vunpack.c.l.b16 %v669
    %v690 = vunpack.c.l.b16 %v670
    %v691 = vpack.c.b16 %v684, %v683
    %v692 = vpack.c.b16 %v686, %v685
    %v693 = vpack.c.b16 %v688, %v687
    %v694 = vpack.c.b16 %v690, %v689
    %vm699 = vcmask 523264
    %v701 = vsel %vm699, %v662, 0
    %703 = vmatpush.bf16.msra.mxu0 0
    %704 = vmatpush.bf16.msra.mxu0 0
    %705 = vmatpush.bf16.msra.mxu0 0
    %706 = vmatpush.bf16.msra.mxu0 0
    %707 = vmatpush.bf16.msra.mxu0 %v694
    %708 = vmatpush.bf16.msra.mxu0 %v693
    %709 = vmatpush.bf16.msra.mxu0 %v692
    %710 = vmatpush.bf16.msra.mxu0 %v691
    %711 = vmatmul.bf16.gmra.mxu0 %v701
    %v712 = vpop.f32.mrf.mxu0
    %v713 = vadd.f32 %v673, %v712
    %v714 = vpop.f32.mrf.mxu0
    %v715 = vadd.f32 %v673, %v714
    %716 = vdwg.mxu0
    %v717 = vadd.f32 %v713, %v620
    %v718 = vadd.f32 %v715, %v621
    %v719 = vld [vmem:[#allocation10] sm:$0x1]
    %v720 = vld [vmem:[%s16] sm:$0x1]
    %v721 = vsel %vm196, %v717, 0.0
    %722 = vadd.xlane.f32.xlu0 %v721
    %v723 = vpop.xlane.xlu0 %722
    %v724 = vsel %vm196, %v718, 0.0
    %725 = vadd.xlane.f32.xlu0 %v724
    %v726 = vpop.xlane.xlu0 %725
    %v727 = vmul.f32 %v723, %v573
    %v728 = vmul.f32 %v726, %v573
    %v729 = vsub.f32 %v717, %v727
    %v730 = vsub.f32 %v718, %v728
    %v731 = vmul.f32 %v729, %v729
    %v732 = vmul.f32 %v730, %v730
    %v733 = vsel %vm196, %v731, 0.0
    %734 = vadd.xlane.f32.xlu0 %v733
    %v735 = vpop.xlane.xlu0 %734
    %v736 = vsel %vm196, %v732, 0.0
    %737 = vadd.xlane.f32.xlu0 %v736
    %v738 = vpop.xlane.xlu0 %737
    %v739 = vmul.f32 %v735, %v573
    %v740 = vmul.f32 %v738, %v573
    %v741 = vadd.f32 %v739, 1e-05
    %v742 = vadd.f32 %v740, 1e-05
    %v743 = vrsqrt.pop %v741
    %v744 = vmul.f32 %v743, %v741
    %v745 = vmul.f32 %v744, %v743
    %v746 = vmul.f32 0.5, %v745
    %v747 = vsub.f32 1.5, %v746
    %v748 = vmul.f32 %v743, %v747
    %vm749 = vweird.f32 %v741
    %vm750 = vweird.f32 %v743
    %vm751 = vmor %vm749, %vm750
    %v752 = vsel %vm751, %v743, %v748
    %v753 = vrsqrt.pop %v742
    %v754 = vmul.f32 %v753, %v742
    %v755 = vmul.f32 %v754, %v753
    %v756 = vmul.f32 0.5, %v755
    %v757 = vsub.f32 1.5, %v756
    %v758 = vmul.f32 %v753, %v757
    %vm759 = vweird.f32 %v742
    %vm760 = vweird.f32 %v753
    %vm761 = vmor %vm759, %vm760
    %v762 = vsel %vm761, %v753, %v758
    %v763 = vmul.f32 %v729, %v752
    %v764 = vmul.f32 %v730, %v762
    %v766 = vperm.slane %v719, 0
    %v768 = vmul.f32 %v763, %v766
    %v769 = vmul.f32 %v764, %v766
    %v771 = vperm.slane %v720, 0
    %v773 = vadd.f32 %v768, %v771
    %v774 = vadd.f32 %v769, %v771
    %v775 = vpack.c.bf16 %v774, %v773
    %s776 = scalar_lea.vmem %s5, 16
    %v777 = vld [vmem:[%s776] sm:$0xf]
    %v778 = vld [vmem:[%s776 + $0x4] sm:$0xf]
    %v779 = vld [vmem:[%s776 + $0x8] sm:$0xf]
    %v780 = vld [vmem:[%s776 + $0xc] sm:$0xf]
    %s781 = scalar_lea.vmem %s6, 1
    %v782 = vld [vmem:[%s781] sm:$0x1]
    %v784 = vperm.slane %v782, 0
    %v790 = vunpack.c.l.b16 %v777
    %v791 = vunpack.c.l.b16 %v778
    %v792 = vunpack.c.l.b16 %v779
    %v793 = vunpack.c.l.b16 %v780
    %v794 = vpack.c.b16 %v791, %v790
    %v795 = vpack.c.b16 %v793, %v792
    %v799 = vsel %vm196, %v775, 0
    %801 = vmatpush.bf16.msra.mxu0 0
    %802 = vmatpush.bf16.msra.mxu0 0
    %803 = vmatpush.bf16.msra.mxu0 0
    %804 = vmatpush.bf16.msra.mxu0 0
    %805 = vmatpush.bf16.msra.mxu0 0
    %806 = vmatpush.bf16.msra.mxu0 0
    %807 = vmatpush.bf16.msra.mxu0 %v795
    %808 = vmatpush.bf16.msra.mxu0 %v794
    %809 = vmatmul.bf16.gmra.mxu0 %v799
    %v810 = vpop.f32.mrf.mxu0
    %v811 = vadd.f32 %v784, %v810
    %v812 = vpop.f32.mrf.mxu0
    %v813 = vadd.f32 %v784, %v812
    %814 = vdwg.mxu0
    %v815 = vpack.c.bf16 %v811, %v811
    %v816 = vpack.c.bf16 %v813, %v813
    %v819 = vunpack.c.l.b16 %v815
    %v820 = vunpack.c.l.b16 %v816
    %v821 = vpack.c.b16 %v820, %v819
    %822 = vrot.lane.b32.xlu0 %v821, 120
    %v823 = vpop.permute.xlu0 %822
    %v825 = vsel %vm223, %v821, 0
    %v828 = vsel %vm223, %v823, 0
    %830 = vmatpush.bf16.xpose.msra.mxu0 0
    %831 = vmatpush.bf16.xpose.msra.mxu0 0
    %832 = vmatpush.bf16.xpose.msra.mxu0 0
    %833 = vmatpush.bf16.xpose.msra.mxu0 0
    %834 = vmatpush.bf16.xpose.msra.mxu0 0
    %835 = vmatpush.bf16.xpose.msra.mxu0 0
    %836 = vmatpush.bf16.xpose.msra.mxu0 0
    %837 = vmatpush.bf16.xpose.msra.mxu0 %v828
    %838 = vmatmul.bf16.gmra.mxu0 %v825
    %v839 = vpop.f32.mrf.mxu0
    %v840 = vadd.f32 %v173, %v839
    %v841 = vpop.f32.mrf.mxu0
    %v842 = vadd.f32 %v174, %v841
    %843 = vdwg.mxu0
    %v844 = vsel %vm151, %v840, -inf
    %845 = vmax.xlane.f32.xlu0 %v844
    %v846 = vpop.xlane.xlu0 %845
    %v847 = vsel %vm151, %v842, -inf
    %848 = vmax.xlane.f32.xlu0 %v847
    %v849 = vpop.xlane.xlu0 %848
    %v850 = vsub.f32 %v840, %v846
    %v851 = vsub.f32 %v842, %v849
    %v852 = vmul.f32 %v850, 1.442695
    %v853 = vpow.pop %v852
    %v854 = vmul.f32 %v851, 1.442695
    %v855 = vpow.pop %v854
    %v856 = vsel %vm151, %v853, 0.0
    %857 = vadd.xlane.f32.xlu0 %v856
    %v858 = vpop.xlane.xlu0 %857
    %v859 = vsel %vm151, %v855, 0.0
    %860 = vadd.xlane.f32.xlu0 %v859
    %v861 = vpop.xlane.xlu0 %860
    %v862 = vrcp.pop %v858
    %v863 = vrcp.pop %v861
    %v864 = vmul.f32 %v853, %v862
    %v865 = vmul.f32 %v855, %v863
    %v866 = vpack.c.bf16 %v865, %v864
    %867 = vrot.lane.b32.xlu0 %v821, 112
    %v868 = vpop.permute.xlu0 %867
    %v871 = vsel %vm151, %v866, 0
    %873 = vmatpush.bf16.msra.mxu0 0
    %874 = vmatpush.bf16.msra.mxu0 0
    %875 = vmatpush.bf16.msra.mxu0 0
    %876 = vmatpush.bf16.msra.mxu0 0
    %877 = vmatpush.bf16.msra.mxu0 0
    %878 = vmatpush.bf16.msra.mxu0 0
    %879 = vmatpush.bf16.msra.mxu0 0
    %880 = vmatpush.bf16.msra.mxu0 %v868
    %881 = vmatmul.bf16.gmra.mxu0 %v871
    %v882 = vpop.f32.mrf.mxu0
    %v883 = vadd.f32 0.0, %v882
    %v884 = vpop.f32.mrf.mxu0
    %v885 = vadd.f32 0.0, %v884
    %886 = vdwg.mxu0
    %887 = vrot.lane.b32.xlu0 %v821, 104
    %v888 = vpop.permute.xlu0 %887
    %889 = vrot.lane.b32.xlu0 %v821, 96
    %v890 = vpop.permute.xlu0 %889
    %v892 = vsel %vm223, %v888, 0
    %v895 = vsel %vm223, %v890, 0
    %897 = vmatpush.bf16.xpose.msra.mxu0 0
    %898 = vmatpush.bf16.xpose.msra.mxu0 0
    %899 = vmatpush.bf16.xpose.msra.mxu0 0
    %900 = vmatpush.bf16.xpose.msra.mxu0 0
    %901 = vmatpush.bf16.xpose.msra.mxu0 0
    %902 = vmatpush.bf16.xpose.msra.mxu0 0
    %903 = vmatpush.bf16.xpose.msra.mxu0 0
    %904 = vmatpush.bf16.xpose.msra.mxu0 %v895
    %905 = vmatmul.bf16.gmra.mxu0 %v892
    %v906 = vpop.f32.mrf.mxu0
    %v907 = vadd.f32 %v173, %v906
    %v908 = vpop.f32.mrf.mxu0
    %v909 = vadd.f32 %v174, %v908
    %910 = vdwg.mxu0
    %v911 = vsel %vm151, %v907, -inf
    %912 = vmax.xlane.f32.xlu0 %v911
    %v913 = vpop.xlane.xlu0 %912
    %v914 = vsel %vm151, %v909, -inf
    %915 = vmax.xlane.f32.xlu0 %v914
    %v916 = vpop.xlane.xlu0 %915
    %v917 = vsub.f32 %v907, %v913
    %v918 = vsub.f32 %v909, %v916
    %v919 = vmul.f32 %v917, 1.442695
    %v920 = vpow.pop %v919
    %v921 = vmul.f32 %v918, 1.442695
    %v922 = vpow.pop %v921
    %v923 = vsel %vm151, %v920, 0.0
    %924 = vadd.xlane.f32.xlu0 %v923
    %v925 = vpop.xlane.xlu0 %924
    %v926 = vsel %vm151, %v922, 0.0
    %927 = vadd.xlane.f32.xlu0 %v926
    %v928 = vpop.xlane.xlu0 %927
    %v929 = vrcp.pop %v925
    %v930 = vrcp.pop %v928
    %v931 = vmul.f32 %v920, %v929
    %v932 = vmul.f32 %v922, %v930
    %v933 = vpack.c.bf16 %v932, %v931
    %934 = vrot.lane.b32.xlu0 %v821, 88
    %v935 = vpop.permute.xlu0 %934
    %v938 = vsel %vm151, %v933, 0
    %940 = vmatpush.bf16.msra.mxu0 0
    %941 = vmatpush.bf16.msra.mxu0 0
    %942 = vmatpush.bf16.msra.mxu0 0
    %943 = vmatpush.bf16.msra.mxu0 0
    %944 = vmatpush.bf16.msra.mxu0 0
    %945 = vmatpush.bf16.msra.mxu0 0
    %946 = vmatpush.bf16.msra.mxu0 0
    %947 = vmatpush.bf16.msra.mxu0 %v935
    %948 = vmatmul.bf16.gmra.mxu0 %v938
    %v949 = vpop.f32.mrf.mxu0
    %v950 = vadd.f32 0.0, %v949
    %v951 = vpop.f32.mrf.mxu0
    %v952 = vadd.f32 0.0, %v951
    %953 = vdwg.mxu0
    %954 = vrot.lane.b32.xlu0 %v821, 80
    %v955 = vpop.permute.xlu0 %954
    %956 = vrot.lane.b32.xlu0 %v821, 72
    %v957 = vpop.permute.xlu0 %956
    %v959 = vsel %vm223, %v955, 0
    %v962 = vsel %vm223, %v957, 0
    %964 = vmatpush.bf16.xpose.msra.mxu0 0
    %965 = vmatpush.bf16.xpose.msra.mxu0 0
    %966 = vmatpush.bf16.xpose.msra.mxu0 0
    %967 = vmatpush.bf16.xpose.msra.mxu0 0
    %968 = vmatpush.bf16.xpose.msra.mxu0 0
    %969 = vmatpush.bf16.xpose.msra.mxu0 0
    %970 = vmatpush.bf16.xpose.msra.mxu0 0
    %971 = vmatpush.bf16.xpose.msra.mxu0 %v962
    %972 = vmatmul.bf16.gmra.mxu0 %v959
    %v973 = vpop.f32.mrf.mxu0
    %v974 = vadd.f32 %v173, %v973
    %v975 = vpop.f32.mrf.mxu0
    %v976 = vadd.f32 %v174, %v975
    %977 = vdwg.mxu0
    %v978 = vsel %vm151, %v974, -inf
    %979 = vmax.xlane.f32.xlu0 %v978
    %v980 = vpop.xlane.xlu0 %979
    %v981 = vsel %vm151, %v976, -inf
    %982 = vmax.xlane.f32.xlu0 %v981
    %v983 = vpop.xlane.xlu0 %982
    %v984 = vsub.f32 %v974, %v980
    %v985 = vsub.f32 %v976, %v983
    %v986 = vmul.f32 %v984, 1.442695
    %v987 = vpow.pop %v986
    %v988 = vmul.f32 %v985, 1.442695
    %v989 = vpow.pop %v988
    %v990 = vsel %vm151, %v987, 0.0
    %991 = vadd.xlane.f32.xlu0 %v990
    %v992 = vpop.xlane.xlu0 %991
    %v993 = vsel %vm151, %v989, 0.0
    %994 = vadd.xlane.f32.xlu0 %v993
    %v995 = vpop.xlane.xlu0 %994
    %v996 = vrcp.pop %v992
    %v997 = vrcp.pop %v995
    %v998 = vmul.f32 %v987, %v996
    %v999 = vmul.f32 %v989, %v997
    %v1000 = vpack.c.bf16 %v999, %v998
    %1001 = vrot.lane.b32.xlu0 %v821, 64
    %v1002 = vpop.permute.xlu0 %1001
    %v1005 = vsel %vm151, %v1000, 0
    %1007 = vmatpush.bf16.msra.mxu0 0
    %1008 = vmatpush.bf16.msra.mxu0 0
    %1009 = vmatpush.bf16.msra.mxu0 0
    %1010 = vmatpush.bf16.msra.mxu0 0
    %1011 = vmatpush.bf16.msra.mxu0 0
    %1012 = vmatpush.bf16.msra.mxu0 0
    %1013 = vmatpush.bf16.msra.mxu0 0
    %1014 = vmatpush.bf16.msra.mxu0 %v1002
    %1015 = vmatmul.bf16.gmra.mxu0 %v1005
    %v1016 = vpop.f32.mrf.mxu0
    %v1017 = vadd.f32 0.0, %v1016
    %v1018 = vpop.f32.mrf.mxu0
    %v1019 = vadd.f32 0.0, %v1018
    %1020 = vdwg.mxu0
    %1021 = vrot.lane.b32.xlu0 %v821, 56
    %v1022 = vpop.permute.xlu0 %1021
    %1023 = vrot.lane.b32.xlu0 %v821, 48
    %v1024 = vpop.permute.xlu0 %1023
    %v1026 = vsel %vm223, %v1022, 0
    %v1029 = vsel %vm223, %v1024, 0
    %1031 = vmatpush.bf16.xpose.msra.mxu0 0
    %1032 = vmatpush.bf16.xpose.msra.mxu0 0
    %1033 = vmatpush.bf16.xpose.msra.mxu0 0
    %1034 = vmatpush.bf16.xpose.msra.mxu0 0
    %1035 = vmatpush.bf16.xpose.msra.mxu0 0
    %1036 = vmatpush.bf16.xpose.msra.mxu0 0
    %1037 = vmatpush.bf16.xpose.msra.mxu0 0
    %1038 = vmatpush.bf16.xpose.msra.mxu0 %v1029
    %1039 = vmatmul.bf16.gmra.mxu0 %v1026
    %v1040 = vpop.f32.mrf.mxu0
    %v1041 = vadd.f32 %v173, %v1040
    %v1042 = vpop.f32.mrf.mxu0
    %v1043 = vadd.f32 %v174, %v1042
    %1044 = vdwg.mxu0
    %v1045 = vsel %vm151, %v1041, -inf
    %1046 = vmax.xlane.f32.xlu0 %v1045
    %v1047 = vpop.xlane.xlu0 %1046
    %v1048 = vsel %vm151, %v1043, -inf
    %1049 = vmax.xlane.f32.xlu0 %v1048
    %v1050 = vpop.xlane.xlu0 %1049
    %v1051 = vsub.f32 %v1041, %v1047
    %v1052 = vsub.f32 %v1043, %v1050
    %v1053 = vmul.f32 %v1051, 1.442695
    %v1054 = vpow.pop %v1053
    %v1055 = vmul.f32 %v1052, 1.442695
    %v1056 = vpow.pop %v1055
    %v1057 = vsel %vm151, %v1054, 0.0
    %1058 = vadd.xlane.f32.xlu0 %v1057
    %v1059 = vpop.xlane.xlu0 %1058
    %v1060 = vsel %vm151, %v1056, 0.0
    %1061 = vadd.xlane.f32.xlu0 %v1060
    %v1062 = vpop.xlane.xlu0 %1061
    %v1063 = vrcp.pop %v1059
    %v1064 = vrcp.pop %v1062
    %v1065 = vmul.f32 %v1054, %v1063
    %v1066 = vmul.f32 %v1056, %v1064
    %v1067 = vpack.c.bf16 %v1066, %v1065
    %1068 = vrot.lane.b32.xlu0 %v821, 40
    %v1069 = vpop.permute.xlu0 %1068
    %v1072 = vsel %vm151, %v1067, 0
    %1074 = vmatpush.bf16.msra.mxu0 0
    %1075 = vmatpush.bf16.msra.mxu0 0
    %1076 = vmatpush.bf16.msra.mxu0 0
    %1077 = vmatpush.bf16.msra.mxu0 0
    %1078 = vmatpush.bf16.msra.mxu0 0
    %1079 = vmatpush.bf16.msra.mxu0 0
    %1080 = vmatpush.bf16.msra.mxu0 0
    %1081 = vmatpush.bf16.msra.mxu0 %v1069
    %1082 = vmatmul.bf16.gmra.mxu0 %v1072
    %v1083 = vpop.f32.mrf.mxu0
    %v1084 = vadd.f32 0.0, %v1083
    %v1085 = vpop.f32.mrf.mxu0
    %v1086 = vadd.f32 0.0, %v1085
    %1087 = vdwg.mxu0
    %1090 = vrot.lane.b32.xlu0 %v950, 8
    %v1091 = vpop.permute.xlu0 %1090
    %1092 = vrot.lane.b32.xlu0 %v952, 8
    %v1093 = vpop.permute.xlu0 %1092
    %1098 = vrot.lane.b32.xlu0 %v1017, 16
    %v1099 = vpop.permute.xlu0 %1098
    %1100 = vrot.lane.b32.xlu0 %v1019, 16
    %v1101 = vpop.permute.xlu0 %1100
    %1106 = vrot.lane.b32.xlu0 %v1084, 24
    %v1107 = vpop.permute.xlu0 %1106
    %1108 = vrot.lane.b32.xlu0 %v1086, 24
    %v1109 = vpop.permute.xlu0 %1108
    %v1112 = vsel %vm223, %v883, %v1091
    %v1113 = vsel %vm223, %v885, %v1093
    %v1114 = vsel %vm151, %v1112, %v1099
    %v1115 = vsel %vm151, %v1113, %v1101
    %v1116 = vsel %vm516, %v1114, %v1107
    %v1117 = vsel %vm516, %v1115, %v1109
    %v1118 = vpack.c.bf16 %v1117, %v1116
    %s1119 = scalar_lea.vmem %s7, 16
    %v1120 = vld [vmem:[%s1119] sm:$0xf]
    %v1121 = vld [vmem:[%s1119 + $0x4] sm:$0xf]
    %v1122 = vld [vmem:[%s1119 + $0x8] sm:$0xf]
    %v1123 = vld [vmem:[%s1119 + $0xc] sm:$0xf]
    %s1124 = scalar_lea.vmem %s8, 1
    %v1125 = vld [vmem:[%s1124] sm:$0x1]
    %v1127 = vperm.slane %v1125, 0
    %v1133 = vunpack.c.l.b16 %v1120
    %v1134 = vunpack.c.l.b16 %v1121
    %v1135 = vunpack.c.l.b16 %v1122
    %v1136 = vunpack.c.l.b16 %v1123
    %v1137 = vpack.c.b16 %v1134, %v1133
    %v1138 = vpack.c.b16 %v1136, %v1135
    %v1142 = vsel %vm196, %v1118, 0
    %1144 = vmatpush.bf16.msra.mxu0 0
    %1145 = vmatpush.bf16.msra.mxu0 0
    %1146 = vmatpush.bf16.msra.mxu0 0
    %1147 = vmatpush.bf16.msra.mxu0 0
    %1148 = vmatpush.bf16.msra.mxu0 0
    %1149 = vmatpush.bf16.msra.mxu0 0
    %1150 = vmatpush.bf16.msra.mxu0 %v1138
    %1151 = vmatpush.bf16.msra.mxu0 %v1137
    %1152 = vmatmul.bf16.gmra.mxu0 %v1142
    %v1153 = vpop.f32.mrf.mxu0
    %v1154 = vadd.f32 %v1127, %v1153
    %v1155 = vpop.f32.mrf.mxu0
    %v1156 = vadd.f32 %v1127, %v1155
    %1157 = vdwg.mxu0
    %v1158 = vadd.f32 %v1154, %v773
    %v1159 = vadd.f32 %v1156, %v774
    %s1160 = scalar_lea.vmem %s9, 1
    %v1161 = vld [vmem:[%s1160] sm:$0x1]
    %s1162 = scalar_lea.vmem %s10, 1
    %v1163 = vld [vmem:[%s1162] sm:$0x1]
    %v1164 = vsel %vm196, %v1158, 0.0
    %1165 = vadd.xlane.f32.xlu0 %v1164
    %v1166 = vpop.xlane.xlu0 %1165
    %v1167 = vsel %vm196, %v1159, 0.0
    %1168 = vadd.xlane.f32.xlu0 %v1167
    %v1169 = vpop.xlane.xlu0 %1168
    %v1170 = vmul.f32 %v1166, %v573
    %v1171 = vmul.f32 %v1169, %v573
    %v1172 = vsub.f32 %v1158, %v1170
    %v1173 = vsub.f32 %v1159, %v1171
    %v1174 = vmul.f32 %v1172, %v1172
    %v1175 = vmul.f32 %v1173, %v1173
    %v1176 = vsel %vm196, %v1174, 0.0
    %1177 = vadd.xlane.f32.xlu0 %v1176
    %v1178 = vpop.xlane.xlu0 %1177
    %v1179 = vsel %vm196, %v1175, 0.0
    %1180 = vadd.xlane.f32.xlu0 %v1179
    %v1181 = vpop.xlane.xlu0 %1180
    %v1182 = vmul.f32 %v1178, %v573
    %v1183 = vmul.f32 %v1181, %v573
    %v1184 = vadd.f32 %v1182, 1e-05
    %v1185 = vadd.f32 %v1183, 1e-05
    %v1186 = vrsqrt.pop %v1184
    %v1187 = vmul.f32 %v1186, %v1184
    %v1188 = vmul.f32 %v1187, %v1186
    %v1189 = vmul.f32 0.5, %v1188
    %v1190 = vsub.f32 1.5, %v1189
    %v1191 = vmul.f32 %v1186, %v1190
    %vm1192 = vweird.f32 %v1184
    %vm1193 = vweird.f32 %v1186
    %vm1194 = vmor %vm1192, %vm1193
    %v1195 = vsel %vm1194, %v1186, %v1191
    %v1196 = vrsqrt.pop %v1185
    %v1197 = vmul.f32 %v1196, %v1185
    %v1198 = vmul.f32 %v1197, %v1196
    %v1199 = vmul.f32 0.5, %v1198
    %v1200 = vsub.f32 1.5, %v1199
    %v1201 = vmul.f32 %v1196, %v1200
    %vm1202 = vweird.f32 %v1185
    %vm1203 = vweird.f32 %v1196
    %vm1204 = vmor %vm1202, %vm1203
    %v1205 = vsel %vm1204, %v1196, %v1201
    %v1206 = vmul.f32 %v1172, %v1195
    %v1207 = vmul.f32 %v1173, %v1205
    %v1209 = vperm.slane %v1161, 0
    %v1211 = vmul.f32 %v1206, %v1209
    %v1212 = vmul.f32 %v1207, %v1209
    %v1214 = vperm.slane %v1163, 0
    %v1216 = vadd.f32 %v1211, %v1214
    %v1217 = vadd.f32 %v1212, %v1214
    %v1218 = vpack.c.bf16 %v1217, %v1216
    %s1219 = scalar_lea.vmem %s11, 16
    %v1220 = vld [vmem:[%s1219] sm:$0xf]
    %v1221 = vld [vmem:[%s1219 + $0x4] sm:$0xf]
    %v1222 = vld [vmem:[%s1219 + $0x8] sm:$0xf]
    %v1223 = vld [vmem:[%s1219 + $0xc] sm:$0xf]
    %s1224 = scalar_lea.vmem %s12, 1
    %v1225 = vld [vmem:[%s1224] sm:$0x1]
    %v1227 = vperm.slane %v1225, 0
    %v1233 = vunpack.c.l.b16 %v1220
    %v1234 = vunpack.c.l.b16 %v1221
    %v1235 = vunpack.c.l.b16 %v1222
    %v1236 = vunpack.c.l.b16 %v1223
    %v1237 = vpack.c.b16 %v1234, %v1233
    %v1238 = vpack.c.b16 %v1236, %v1235
    %v1242 = vsel %vm196, %v1218, 0
    %1244 = vmatpush.bf16.msra.mxu0 0
    %1245 = vmatpush.bf16.msra.mxu0 0
    %1246 = vmatpush.bf16.msra.mxu0 0
    %1247 = vmatpush.bf16.msra.mxu0 0
    %1248 = vmatpush.bf16.msra.mxu0 0
    %1249 = vmatpush.bf16.msra.mxu0 0
    %1250 = vmatpush.bf16.msra.mxu0 %v1238
    %1251 = vmatpush.bf16.msra.mxu0 %v1237
    %1252 = vmatmul.bf16.gmra.mxu0 %v1242
    %v1253 = vpop.f32.mrf.mxu0
    %v1254 = vadd.f32 %v1227, %v1253
    %v1255 = vpop.f32.mrf.mxu0
    %v1256 = vadd.f32 %v1227, %v1255
    %1257 = vdwg.mxu0
    %v1258 = vmax.f32 %v1254, 0.0
    %v1259 = vmax.f32 %v1256, 0.0
    %v1260 = vpack.c.bf16 %v1259, %v1258
    %s1261 = scalar_lea.vmem %s13, 32
    %v1262 = vld [vmem:[%s1261] sm:$0xf]
    %v1263 = vld [vmem:[%s1261 + $0x4] sm:$0xf]
    %v1264 = vld [vmem:[%s1261 + $0x8] sm:$0xf]
    %v1265 = vld [vmem:[%s1261 + $0xc] sm:$0xf]
    %v1266 = vld [vmem:[%s1261 + $0x10] sm:$0xf]
    %v1267 = vld [vmem:[%s1261 + $0x14] sm:$0xf]
    %v1268 = vld [vmem:[%s1261 + $0x18] sm:$0xf]
    %v1269 = vld [vmem:[%s1261 + $0x1c] sm:$0xf]
    %s1270 = scalar_lea.vmem %s14, 1
    %v1271 = vld [vmem:[%s1270] sm:$0x1]
    %v1273 = vperm.slane %v1271, 0
    %v1283 = vunpack.c.l.b16 %v1262
    %v1284 = vunpack.c.l.b16 %v1263
    %v1285 = vunpack.c.l.b16 %v1264
    %v1286 = vunpack.c.l.b16 %v1265
    %v1287 = vunpack.c.l.b16 %v1266
    %v1288 = vunpack.c.l.b16 %v1267
    %v1289 = vunpack.c.l.b16 %v1268
    %v1290 = vunpack.c.l.b16 %v1269
    %v1291 = vpack.c.b16 %v1284, %v1283
    %v1292 = vpack.c.b16 %v1286, %v1285
    %v1293 = vpack.c.b16 %v1288, %v1287
    %v1294 = vpack.c.b16 %v1290, %v1289
    %v1300 = vsel %vm699, %v1260, 0
    %1302 = vmatpush.bf16.msra.mxu0 0
    %1303 = vmatpush.bf16.msra.mxu0 0
    %1304 = vmatpush.bf16.msra.mxu0 0
    %1305 = vmatpush.bf16.msra.mxu0 0
    %1306 = vmatpush.bf16.msra.mxu0 %v1294
    %1307 = vmatpush.bf16.msra.mxu0 %v1293
    %1308 = vmatpush.bf16.msra.mxu0 %v1292
    %1309 = vmatpush.bf16.msra.mxu0 %v1291
    %1310 = vmatmul.bf16.gmra.mxu0 %v1300
    %v1311 = vpop.f32.mrf.mxu0
    %v1312 = vadd.f32 %v1273, %v1311
    %v1313 = vpop.f32.mrf.mxu0
    %v1314 = vadd.f32 %v1273, %v1313
    %1315 = vdwg.mxu0
    %v1316 = vadd.f32 %v1312, %v1216
    %v1317 = vadd.f32 %v1314, %v1217
    %s1318 = scalar_lea.vmem [#allocation10], 1
    %v1319 = vld [vmem:[%s1318] sm:$0x1]
    %s1320 = scalar_lea.vmem %s16, 1
    %v1321 = vld [vmem:[%s1320] sm:$0x1]
    %v1322 = vsel %vm196, %v1316, 0.0
    %1323 = vadd.xlane.f32.xlu0 %v1322
    %v1324 = vpop.xlane.xlu0 %1323
    %v1325 = vsel %vm196, %v1317, 0.0
    %1326 = vadd.xlane.f32.xlu0 %v1325
    %v1327 = vpop.xlane.xlu0 %1326
    %v1328 = vmul.f32 %v1324, %v573
    %v1329 = vmul.f32 %v1327, %v573
    %v1330 = vsub.f32 %v1316, %v1328
    %v1331 = vsub.f32 %v1317, %v1329
    %v1332 = vmul.f32 %v1330, %v1330
    %v1333 = vmul.f32 %v1331, %v1331
    %v1334 = vsel %vm196, %v1332, 0.0
    %1335 = vadd.xlane.f32.xlu0 %v1334
    %v1336 = vpop.xlane.xlu0 %1335
    %v1337 = vsel %vm196, %v1333, 0.0
    %1338 = vadd.xlane.f32.xlu0 %v1337
    %v1339 = vpop.xlane.xlu0 %1338
    %v1340 = vmul.f32 %v1336, %v573
    %v1341 = vmul.f32 %v1339, %v573
    %v1342 = vadd.f32 %v1340, 1e-05
    %v1343 = vadd.f32 %v1341, 1e-05
    %v1344 = vrsqrt.pop %v1342
    %v1345 = vmul.f32 %v1344, %v1342
    %v1346 = vmul.f32 %v1345, %v1344
    %v1347 = vmul.f32 0.5, %v1346
    %v1348 = vsub.f32 1.5, %v1347
    %v1349 = vmul.f32 %v1344, %v1348
    %vm1350 = vweird.f32 %v1342
    %vm1351 = vweird.f32 %v1344
    %vm1352 = vmor %vm1350, %vm1351
    %v1353 = vsel %vm1352, %v1344, %v1349
    %v1354 = vrsqrt.pop %v1343
    %v1355 = vmul.f32 %v1354, %v1343
    %v1356 = vmul.f32 %v1355, %v1354
    %v1357 = vmul.f32 0.5, %v1356
    %v1358 = vsub.f32 1.5, %v1357
    %v1359 = vmul.f32 %v1354, %v1358
    %vm1360 = vweird.f32 %v1343
    %vm1361 = vweird.f32 %v1354
    %vm1362 = vmor %vm1360, %vm1361
    %v1363 = vsel %vm1362, %v1354, %v1359
    %v1364 = vmul.f32 %v1330, %v1353
    %v1365 = vmul.f32 %v1331, %v1363
    %v1367 = vperm.slane %v1319, 0
    %v1369 = vmul.f32 %v1364, %v1367
    %v1370 = vmul.f32 %v1365, %v1367
    %v1372 = vperm.slane %v1321, 0
    %v1374 = vadd.f32 %v1369, %v1372
    %v1375 = vadd.f32 %v1370, %v1372
    %1376 = vst.msk [vmem:[#allocation11] sm:$0xff] %vm196, %v1374
    %1377 = vst.msk [vmem:[#allocation11 + $0x8] sm:$0xff] %vm196, %v1375
    // Predicated region
    $region90: #{tpu_custom_call.1} parent=1 // pred_check
      _
    $region91: #{tpu_custom_call.1} parent=1 // pred_check_branch
      %1379 = sbr.rel (0) target = $region93
    $region92: #{tpu_custom_call.1} parent=1 // pred_region
      %1381 = vsyncadd [#allocation4], 0
      %s1382 = sshll.u32 [#allocation11], 4
      %s1383 = int_to_ptr.vmem [resolvable:$true] %s1382
      %s1384 = sshll.u32 %s17, 4
      %s1385 = int_to_ptr.hbm [resolvable:$true] %s1384
      %1390 = dma.vmem_to_hbm [thread:$0]  %s1383, 256, %s1385, [#allocation4], 128, 128, 8
    $region93: #{tpu_custom_call.1} parent=1 // pred_fallthru
      _
    // Predicated region
    $region94: #{tpu_custom_call.1} parent=1 // pred_check
      _
    $region95: #{tpu_custom_call.1} parent=1 // pred_check_branch
      %1392 = sbr.rel (0) target = $region97
    $region96: #{tpu_custom_call.1} parent=1 // pred_region
      %1394 = dma.done [#allocation4], 256
    $region97: #{tpu_custom_call.1} parent=1 // pred_fallthru
      _
    %1395 = vsyncpa [#allocation3], 1
    %1396 = vsyncpa [#allocation6], 1
    %1397 = vsyncpa [#allocation9], 1
    %1398 = vsyncpa [#allocation4], 1

</llo_original>
